<compile_context>
chip_gen: v5e
topology: v5e:2x2
jax: 0.10.0
libtpu: 0.0.40
codegen_flags: <defaults>
</compile_context>

<pallas_src>
import functools

import numpy as np
import jax
import jax.numpy as jnp
from jax import lax
from jax.experimental import pallas as pl
from jax.experimental.pallas import tpu as pltpu


def _round_up(x, m):
    return ((x + m - 1) // m) * m


# ----------------------------------------------------------------------------
# The single fused Pallas kernel (whole forward pass, gridless, all in VMEM)
# ----------------------------------------------------------------------------
def _net_kernel(x_ref, nbias_ref, adj_ref, mask_ref,
                w_enc_ref, w_rgcn_ref, b_rgcn_ref,
                w_attn_ref, b_attn_ref,
                wc1_ref, bc1_ref, wc2_ref, bc2_ref,
                o_ref, *, n_modals, num_rel, heads, g, utt_pad):
    f32, bf16 = jnp.float32, jnp.bfloat16

    # ---- SeqEncoder projections (3 Linears fused into one matmul) + speaker/bias ----
    h0 = jnp.dot(x_ref[...], w_enc_ref[...], preferred_element_type=f32) + nbias_ref[...]

    # ---- RGCNConv (root + num_rel relations, mean aggregation) as 2 contractions ----
    # XW = h0 @ [W_root | W_rel_0 | ... | W_rel_{R-1}]  -> [nodes, (R+1)*g], lane-dense
    xw = jnp.dot(h0.astype(bf16), w_rgcn_ref[...], preferred_element_type=f32)
    xw_bf = xw.astype(bf16)
    # rearrange column blocks into row blocks (lane slices + sublane concat, cheap)
    xw_perm = jnp.concatenate(
        [xw_bf[:, i * g:(i + 1) * g] for i in range(num_rel + 1)], axis=0)
    # h1 = [I | adj_0 | ... | adj_{R-1}] @ XW_perm  (single K=(R+1)*nodes matmul)
    h1 = jnp.dot(adj_ref[...], xw_perm, preferred_element_type=f32) + b_rgcn_ref[...]

    # ---- TransformerConv: fused QKV+skip projection, masked multi-head attention ----
    hg = heads * g
    qkvs = jnp.dot(h1.astype(bf16), w_attn_ref[...],
                   preferred_element_type=f32) + b_attn_ref[...]        # [nodes, 4*hg]
    mask = mask_ref[...]
    head_outs = []
    for h in range(heads):
        q = qkvs[:, h * g:(h + 1) * g]                    # 1/sqrt(g) folded host-side
        k = qkvs[:, hg + h * g: hg + (h + 1) * g]
        v = qkvs[:, 2 * hg + h * g: 2 * hg + (h + 1) * g]
        s = lax.dot_general(q.astype(bf16), k.astype(bf16),
                            (((1,), (1,)), ((), ())),
                            preferred_element_type=f32) + mask
        s = s - jnp.max(s, axis=-1, keepdims=True)
        p = jnp.exp(s)
        # approx reciprocal rides the EUP slot; approx=False for exact PyTorch parity
        p = p * pl.reciprocal(jnp.sum(p, axis=-1, keepdims=True), approx=True)
        head_outs.append(jnp.dot(p.astype(bf16), v.astype(bf16),
                                 preferred_element_type=f32))
    h2 = jnp.concatenate(head_outs, axis=-1) + qkvs[:, 3 * hg:4 * hg]   # attn + skip

    # ---- late_concat: modality-major node layout -> aligned row blocks, lane concat ----
    gf = jnp.concatenate(
        [h2[m * utt_pad:(m + 1) * utt_pad, :] for m in range(n_modals)], axis=1)

    # ---- Classifier: Linear + ReLU + Linear (output padded to 128 lanes) ----
    hidden = jnp.maximum(
        jnp.dot(gf.astype(bf16), wc1_ref[...], preferred_element_type=f32)
        + bc1_ref[...], 0.0)
    o_ref[...] = jnp.dot(hidden.astype(bf16), wc2_ref[...],
                         preferred_element_type=f32) + bc2_ref[...]


# ----------------------------------------------------------------------------
# Host-side graph construction (batch_graphify bookkeeping) — cached per lengths
# ----------------------------------------------------------------------------
def build_edge_type_to_idx(n_modals):
    idx = {}
    for j in range(n_modals):              # 'intra'
        idx["-1" + str(j) + str(j)] = len(idx)
        idx["0" + str(j) + str(j)] = len(idx)
        idx["1" + str(j) + str(j)] = len(idx)
    for j in range(n_modals):              # 'inter'
        for k in range(n_modals):
            if j != k:
                idx["0" + str(j) + str(k)] = len(idx)
    return idx


@functools.lru_cache(maxsize=None)
def _build_graph_cached(lengths, n_modals, wp, wf, utt_pad):
    """Returns (adj_cat [n, (R+1)*n], attn_mask [n, n]) as numpy float32."""
    edge_type_to_idx = build_edge_type_to_idx(n_modals)
    num_rel = len(edge_type_to_idx)
    nodes_pad = n_modals * utt_pad
    offs = np.concatenate([[0], np.cumsum(lengths)[:-1]]).astype(np.int64)

    def nid(d, m, t):                       # modality-major node ordering
        return m * utt_pad + int(offs[d]) + t

    adj = np.zeros((num_rel, nodes_pad, nodes_pad), np.float32)
    attn_mask = np.full((nodes_pad, nodes_pad), -1e9, np.float32)
    np.fill_diagonal(attn_mask, 0.0)        # padded rows self-attend (finite softmax)

    for d, L in enumerate(lengths):
        for m_i in range(n_modals):
            for t_i in range(L):
                i = nid(d, m_i, t_i)
                # intra-modal edges within past/future window
                for t_j in range(max(0, t_i - wp), min(L, t_i + wf + 1)):
                    j = nid(d, m_i, t_j)
                    tag = "-1" if t_j < t_i else ("0" if t_j == t_i else "1")
                    r = edge_type_to_idx[tag + str(m_i) + str(m_i)]
                    adj[r, i, j] = 1.0
                    attn_mask[i, j] = 0.0
                # inter-modal edges at the same time step
                for m_j in range(n_modals):
                    if m_j == m_i:
                        continue
                    j = nid(d, m_j, t_i)
                    r = edge_type_to_idx["0" + str(m_i) + str(m_j)]
                    adj[r, i, j] = 1.0
                    attn_mask[i, j] = 0.0

    # per-relation mean aggregation (PyG RGCNConv default aggr='mean')
    deg = adj.sum(axis=2, keepdims=True)
    adj = np.where(deg > 0, adj / np.maximum(deg, 1.0), 0.0).astype(np.float32)

    # K-concatenated layout: [ I | adj_0 | ... | adj_{R-1} ]  (identity = root term)
    adj_cat = np.concatenate(
        [np.eye(nodes_pad, dtype=np.float32)] + [adj[r] for r in range(num_rel)],
        axis=1)
    return adj_cat, attn_mask


# ----------------------------------------------------------------------------
# Forward-pass factory: fuses weights once, caches graph tensors, jits the call
# ----------------------------------------------------------------------------
def make_forward(params, cfg):
    lengths = tuple(int(x) for x in cfg["lengths"])
    n_modals, heads, g = cfg["n_modals"], cfg["heads"], cfg["g_dim"]
    wp, wf = cfg["wp"], cfg["wf"]
    total_len = sum(lengths)
    utt_pad = _round_up(total_len, 8)
    num_rel = 3 * n_modals + n_modals * (n_modals - 1)
    a_dim = params["Wa"].shape[0]
    t_dim = params["Wt"].shape[0]
    v_dim = params["Wv"].shape[0]
    tag_size = params["Wc2"].shape[1]
    out_pad = _round_up(tag_size, 128)
    scale = 1.0 / float(np.sqrt(g))
    f32, bf16 = jnp.float32, jnp.bfloat16

    # --- graph tensors (host numpy, cached per lengths signature, uploaded once) ---
    adj_cat_np, mask_np = _build_graph_cached(lengths, n_modals, wp, wf, utt_pad)
    adj_cat = jnp.asarray(adj_cat_np, bf16)
    attn_mask = jnp.asarray(mask_np, f32)

    # --- fused / bf16 weight re-layouts (built once, not in the per-call path) ---
    w_enc = jnp.concatenate([params["Wa"], params["Wt"], params["Wv"]], axis=0).astype(bf16)
    w_rgcn = jnp.concatenate(
        [params["W_root"]] + [params["W_rel"][r] for r in range(num_rel)],
        axis=1).astype(bf16)                                   # [g, (R+1)*g]
    b_rgcn = params["b_rgcn"].reshape(1, -1).astype(f32)
    w_attn = jnp.concatenate(
        [params["Wq"] * scale, params["Wk"], params["Wv2"], params["Wskip"]],
        axis=1).astype(bf16)                                   # [g, 4*heads*g]
    b_attn = jnp.concatenate(
        [params["bq"] * scale, params["bk"], params["bv2"], params["bskip"]]
    ).reshape(1, -1).astype(f32)
    wc1 = params["Wc1"].astype(bf16)
    bc1 = params["bc1"].reshape(1, -1).astype(f32)
    wc2 = jnp.zeros((g, out_pad), f32).at[:, :tag_size].set(params["Wc2"]).astype(bf16)
    bc2 = jnp.zeros((1, out_pad), f32).at[0, :tag_size].set(params["bc2"])
    ba, bt, bv = params["ba"], params["bt"], params["bv"]
    spk_emb = params["spk_emb"]
    valid = jnp.asarray((np.arange(utt_pad) < total_len).astype(np.float32))[:, None]

    kernel = functools.partial(_net_kernel, n_modals=n_modals, num_rel=num_rel,
                               heads=heads, g=g, utt_pad=utt_pad)
    pallas_fn = pl.pallas_call(
        kernel,
        out_shape=jax.ShapeDtypeStruct((utt_pad, out_pad), f32),
        compiler_params=pltpu.CompilerParams(vmem_limit_bytes=32 * 1024 * 1024),
    )

    @jax.jit
    def forward(audio, text, visual, speaker):
        B, Lmax = audio.shape[:2]
        pad = utt_pad - total_len
        # (dialogue, time) -> flattened B*Lmax row (trace-time constant)
        utt_src = np.concatenate(
            [d * Lmax + np.arange(L) for d, L in enumerate(lengths)]).astype(np.int32)
        idx = jnp.asarray(utt_src)

        a_u = jnp.pad(audio.reshape(B * Lmax, -1)[idx], ((0, pad), (0, 0)))
        t_u = jnp.pad(text.reshape(B * Lmax, -1)[idx], ((0, pad), (0, 0)))
        v_u = jnp.pad(visual.reshape(B * Lmax, -1)[idx], ((0, pad), (0, 0)))

        # modality-major node layout: block m = modality m's utterances (zero-padded)
        x_nodes = jnp.concatenate([
            jnp.concatenate([a_u, jnp.zeros((utt_pad, t_dim + v_dim), f32)], axis=1),
            jnp.concatenate([jnp.zeros((utt_pad, a_dim), f32), t_u,
                             jnp.zeros((utt_pad, v_dim), f32)], axis=1),
            jnp.concatenate([jnp.zeros((utt_pad, a_dim + t_dim), f32), v_u], axis=1),
        ], axis=0).astype(bf16)

        # per-node bias = modality bias + speaker embedding (lookup = glue)
        spk_u = jnp.pad(spk_emb[speaker.reshape(-1)[idx]], ((0, pad), (0, 0)))
        node_bias = jnp.concatenate([(spk_u + ba) * valid,
                                     (spk_u + bt) * valid,
                                     (spk_u + bv) * valid], axis=0)

        out = pallas_fn(x_nodes, node_bias, adj_cat, attn_mask,
                        w_enc, w_rgcn, b_rgcn, w_attn, b_attn,
                        wc1, bc1, wc2, bc2)
        logits = out[:total_len, :tag_size]          # drop row / lane padding
        preds = jnp.argmax(logits, axis=-1)          # Classifier returns labels (glue)
        return logits, preds

    return forward


# ----------------------------------------------------------------------------
if __name__ == "__main__":
    # small, shape-consistent config (dataset='iemocap', modalities='atv')
    B, Lmax = 2, 8
    lengths = [8, 6]
    a_dim, t_dim, v_dim = 20, 24, 28
    g_dim = 32                 # hidden_size => g=h1=h2=hc
    heads = 2                  # gnn_nheads
    n_modals, wp, wf = 3, 2, 2
    n_speakers, tag_size = 2, 6
    num_rel = 3 * n_modals + n_modals * (n_modals - 1)   # 15
    ic_dim = g_dim * heads * n_modals                    # 192

    key = jax.random.PRNGKey(0)
    keys = jax.random.split(key, 32)

    def w(i, shape, scale=0.05):
        return jax.random.normal(keys[i], shape, jnp.float32) * scale

    params = {
        "Wa": w(4, (a_dim, g_dim)), "ba": jnp.zeros((g_dim,), jnp.float32),
        "Wt": w(5, (t_dim, g_dim)), "bt": jnp.zeros((g_dim,), jnp.float32),
        "Wv": w(6, (v_dim, g_dim)), "bv": jnp.zeros((g_dim,), jnp.float32),
        "spk_emb": w(7, (n_speakers, g_dim), 0.1),
        "W_rel": w(8, (num_rel, g_dim, g_dim)),
        "W_root": w(9, (g_dim, g_dim)), "b_rgcn": jnp.zeros((g_dim,), jnp.float32),
        "Wq": w(10, (g_dim, heads * g_dim)), "bq": jnp.zeros((heads * g_dim,), jnp.float32),
        "Wk": w(11, (g_dim, heads * g_dim)), "bk": jnp.zeros((heads * g_dim,), jnp.float32),
        "Wv2": w(12, (g_dim, heads * g_dim)), "bv2": jnp.zeros((heads * g_dim,), jnp.float32),
        "Wskip": w(13, (g_dim, heads * g_dim)), "bskip": jnp.zeros((heads * g_dim,), jnp.float32),
        "Wc1": w(14, (ic_dim, g_dim)), "bc1": jnp.zeros((g_dim,), jnp.float32),
        "Wc2": w(15, (g_dim, tag_size)), "bc2": jnp.zeros((tag_size,), jnp.float32),
    }

    data = {
        "audio": jax.random.normal(keys[0], (B, Lmax, a_dim), jnp.float32),
        "text": jax.random.normal(keys[1], (B, Lmax, t_dim), jnp.float32),
        "visual": jax.random.normal(keys[2], (B, Lmax, v_dim), jnp.float32),
        "speaker": jax.random.randint(keys[3], (B, Lmax), 0, n_speakers),
        "text_len": jnp.array(lengths, jnp.int32),
    }

    cfg = {"n_modals": n_modals, "heads": heads, "g_dim": g_dim,
           "wp": wp, "wf": wf, "lengths": lengths}

    forward = make_forward(params, cfg)
    logits, preds = forward(data["audio"], data["text"], data["visual"], data["speaker"])
    jax.block_until_ready((logits, preds))
    assert logits.shape == (sum(lengths), tag_size)
    assert preds.shape == (sum(lengths),)
    assert bool(jnp.all(jnp.isfinite(logits)))
    print("KERNEL_OK")
</pallas_src>

<mosaic_0001>
module attributes {stable_mosaic.version = 11 : i64} {
  func.func @_net_kernel(%arg0: memref<48x72xbf16, #tpu.memory_space<vmem>>, %arg1: memref<48x32xf32, #tpu.memory_space<vmem>>, %arg2: memref<48x768xbf16, #tpu.memory_space<vmem>>, %arg3: memref<48x48xf32, #tpu.memory_space<vmem>>, %arg4: memref<72x32xbf16, #tpu.memory_space<vmem>>, %arg5: memref<32x512xbf16, #tpu.memory_space<vmem>>, %arg6: memref<1x32xf32, #tpu.memory_space<vmem>>, %arg7: memref<32x256xbf16, #tpu.memory_space<vmem>>, %arg8: memref<1x256xf32, #tpu.memory_space<vmem>>, %arg9: memref<192x32xbf16, #tpu.memory_space<vmem>>, %arg10: memref<1x32xf32, #tpu.memory_space<vmem>>, %arg11: memref<32x128xbf16, #tpu.memory_space<vmem>>, %arg12: memref<1x128xf32, #tpu.memory_space<vmem>>, %arg13: memref<16x128xf32, #tpu.memory_space<vmem>>) attributes {dimension_semantics = [], scalar_prefetch = 0 : i64, scratch_operands = 0 : i64, tpu.core_type = #tpu.core_type<tc>} {
    %c0 = arith.constant 0 : index
    %c0_0 = arith.constant 0 : index
    %0 = vector.load %arg0[%c0, %c0_0] : memref<48x72xbf16, #tpu.memory_space<vmem>>, vector<48x72xbf16>
    %c0_1 = arith.constant 0 : index
    %c0_2 = arith.constant 0 : index
    %1 = vector.load %arg4[%c0_1, %c0_2] : memref<72x32xbf16, #tpu.memory_space<vmem>>, vector<72x32xbf16>
    %cst = arith.constant dense<0.000000e+00> : vector<48x32xf32>
    %2 = tpu.matmul %0, %1, %cst {dimension_numbers = #tpu.dot_dimension_numbers<[1], [0], [0], [1], [0, 0, 1, 1], [], []>} : vector<48x72xbf16>, vector<72x32xbf16>, vector<48x32xf32> -> vector<48x32xf32>
    %c0_3 = arith.constant 0 : index
    %c0_4 = arith.constant 0 : index
    %3 = vector.load %arg1[%c0_3, %c0_4] : memref<48x32xf32, #tpu.memory_space<vmem>>, vector<48x32xf32>
    %4 = arith.addf %2, %3 : vector<48x32xf32>
    %5 = arith.truncf %4 : vector<48x32xf32> to vector<48x32xbf16>
    %c0_5 = arith.constant 0 : index
    %c0_6 = arith.constant 0 : index
    %6 = vector.load %arg5[%c0_5, %c0_6] : memref<32x512xbf16, #tpu.memory_space<vmem>>, vector<32x512xbf16>
    %cst_7 = arith.constant dense<0.000000e+00> : vector<48x512xf32>
    %7 = tpu.matmul %5, %6, %cst_7 {dimension_numbers = #tpu.dot_dimension_numbers<[1], [0], [0], [1], [0, 0, 1, 1], [], []>} : vector<48x32xbf16>, vector<32x512xbf16>, vector<48x512xf32> -> vector<48x512xf32>
    %8 = arith.truncf %7 : vector<48x512xf32> to vector<48x512xbf16>
    %9 = vector.extract_strided_slice %8 {offsets = [0, 0], sizes = [48, 32], strides = [1, 1]} : vector<48x512xbf16> to vector<48x32xbf16>
    %10 = vector.extract_strided_slice %8 {offsets = [0, 32], sizes = [48, 32], strides = [1, 1]} : vector<48x512xbf16> to vector<48x32xbf16>
    %11 = vector.extract_strided_slice %8 {offsets = [0, 64], sizes = [48, 32], strides = [1, 1]} : vector<48x512xbf16> to vector<48x32xbf16>
    %12 = vector.extract_strided_slice %8 {offsets = [0, 96], sizes = [48, 32], strides = [1, 1]} : vector<48x512xbf16> to vector<48x32xbf16>
    %13 = vector.extract_strided_slice %8 {offsets = [0, 128], sizes = [48, 32], strides = [1, 1]} : vector<48x512xbf16> to vector<48x32xbf16>
    %14 = vector.extract_strided_slice %8 {offsets = [0, 160], sizes = [48, 32], strides = [1, 1]} : vector<48x512xbf16> to vector<48x32xbf16>
    %15 = vector.extract_strided_slice %8 {offsets = [0, 192], sizes = [48, 32], strides = [1, 1]} : vector<48x512xbf16> to vector<48x32xbf16>
    %16 = vector.extract_strided_slice %8 {offsets = [0, 224], sizes = [48, 32], strides = [1, 1]} : vector<48x512xbf16> to vector<48x32xbf16>
    %17 = vector.extract_strided_slice %8 {offsets = [0, 256], sizes = [48, 32], strides = [1, 1]} : vector<48x512xbf16> to vector<48x32xbf16>
    %18 = vector.extract_strided_slice %8 {offsets = [0, 288], sizes = [48, 32], strides = [1, 1]} : vector<48x512xbf16> to vector<48x32xbf16>
    %19 = vector.extract_strided_slice %8 {offsets = [0, 320], sizes = [48, 32], strides = [1, 1]} : vector<48x512xbf16> to vector<48x32xbf16>
    %20 = vector.extract_strided_slice %8 {offsets = [0, 352], sizes = [48, 32], strides = [1, 1]} : vector<48x512xbf16> to vector<48x32xbf16>
    %21 = vector.extract_strided_slice %8 {offsets = [0, 384], sizes = [48, 32], strides = [1, 1]} : vector<48x512xbf16> to vector<48x32xbf16>
    %22 = vector.extract_strided_slice %8 {offsets = [0, 416], sizes = [48, 32], strides = [1, 1]} : vector<48x512xbf16> to vector<48x32xbf16>
    %23 = vector.extract_strided_slice %8 {offsets = [0, 448], sizes = [48, 32], strides = [1, 1]} : vector<48x512xbf16> to vector<48x32xbf16>
    %24 = vector.extract_strided_slice %8 {offsets = [0, 480], sizes = [48, 32], strides = [1, 1]} : vector<48x512xbf16> to vector<48x32xbf16>
    %25 = tpu.concatenate %9, %10, %11, %12, %13, %14, %15, %16, %17, %18, %19, %20, %21, %22, %23, %24 in 0 : vector<48x32xbf16>, vector<48x32xbf16>, vector<48x32xbf16>, vector<48x32xbf16>, vector<48x32xbf16>, vector<48x32xbf16>, vector<48x32xbf16>, vector<48x32xbf16>, vector<48x32xbf16>, vector<48x32xbf16>, vector<48x32xbf16>, vector<48x32xbf16>, vector<48x32xbf16>, vector<48x32xbf16>, vector<48x32xbf16>, vector<48x32xbf16> -> vector<768x32xbf16>
    %c0_8 = arith.constant 0 : index
    %c0_9 = arith.constant 0 : index
    %26 = vector.load %arg2[%c0_8, %c0_9] : memref<48x768xbf16, #tpu.memory_space<vmem>>, vector<48x768xbf16>
    %cst_10 = arith.constant dense<0.000000e+00> : vector<48x32xf32>
    %27 = tpu.matmul %26, %25, %cst_10 {dimension_numbers = #tpu.dot_dimension_numbers<[1], [0], [0], [1], [0, 0, 1, 1], [], []>} : vector<48x768xbf16>, vector<768x32xbf16>, vector<48x32xf32> -> vector<48x32xf32>
    %c0_11 = arith.constant 0 : index
    %c0_12 = arith.constant 0 : index
    %28 = vector.load %arg6[%c0_11, %c0_12] : memref<1x32xf32, #tpu.memory_space<vmem>>, vector<1x32xf32>
    %29 = vector.broadcast %28 : vector<1x32xf32> to vector<48x32xf32>
    %30 = arith.addf %27, %29 : vector<48x32xf32>
    %31 = arith.truncf %30 : vector<48x32xf32> to vector<48x32xbf16>
    %c0_13 = arith.constant 0 : index
    %c0_14 = arith.constant 0 : index
    %32 = vector.load %arg7[%c0_13, %c0_14] : memref<32x256xbf16, #tpu.memory_space<vmem>>, vector<32x256xbf16>
    %cst_15 = arith.constant dense<0.000000e+00> : vector<48x256xf32>
    %33 = tpu.matmul %31, %32, %cst_15 {dimension_numbers = #tpu.dot_dimension_numbers<[1], [0], [0], [1], [0, 0, 1, 1], [], []>} : vector<48x32xbf16>, vector<32x256xbf16>, vector<48x256xf32> -> vector<48x256xf32>
    %c0_16 = arith.constant 0 : index
    %c0_17 = arith.constant 0 : index
    %34 = vector.load %arg8[%c0_16, %c0_17] : memref<1x256xf32, #tpu.memory_space<vmem>>, vector<1x256xf32>
    %35 = vector.broadcast %34 : vector<1x256xf32> to vector<48x256xf32>
    %36 = arith.addf %33, %35 : vector<48x256xf32>
    %c0_18 = arith.constant 0 : index
    %c0_19 = arith.constant 0 : index
    %37 = vector.load %arg3[%c0_18, %c0_19] : memref<48x48xf32, #tpu.memory_space<vmem>>, vector<48x48xf32>
    %38 = vector.extract_strided_slice %36 {offsets = [0, 0], sizes = [48, 32], strides = [1, 1]} : vector<48x256xf32> to vector<48x32xf32>
    %39 = vector.extract_strided_slice %36 {offsets = [0, 64], sizes = [48, 32], strides = [1, 1]} : vector<48x256xf32> to vector<48x32xf32>
    %40 = vector.extract_strided_slice %36 {offsets = [0, 128], sizes = [48, 32], strides = [1, 1]} : vector<48x256xf32> to vector<48x32xf32>
    %41 = arith.truncf %38 : vector<48x32xf32> to vector<48x32xbf16>
    %42 = arith.truncf %39 : vector<48x32xf32> to vector<48x32xbf16>
    %cst_20 = arith.constant dense<0.000000e+00> : vector<48x48xf32>
    %43 = tpu.matmul %41, %42, %cst_20 {dimension_numbers = #tpu.dot_dimension_numbers<[1], [1], [0], [0], [0, 0, 1, 0], [], []>} : vector<48x32xbf16>, vector<48x32xbf16>, vector<48x48xf32> -> vector<48x48xf32>
    %44 = arith.addf %43, %37 : vector<48x48xf32>
    %cst_21 = arith.constant dense<0xFF800000> : vector<48xf32>
    %45 = vector.multi_reduction <maximumf>, %44, %cst_21 [1] : vector<48x48xf32> to vector<48xf32>
    %46 = vector.shape_cast %45 : vector<48xf32> to vector<48x1xf32>
    %47 = vector.broadcast %46 : vector<48x1xf32> to vector<48x48xf32>
    %48 = arith.subf %44, %47 : vector<48x48xf32>
    %49 = math.exp %48 : vector<48x48xf32>
    %cst_22 = arith.constant dense<0.000000e+00> : vector<48xf32>
    %50 = vector.multi_reduction <add>, %49, %cst_22 [1] : vector<48x48xf32> to vector<48xf32>
    %51 = vector.shape_cast %50 : vector<48xf32> to vector<48x1xf32>
    %52 = tpu.reciprocal %51 {approx = true} : vector<48x1xf32> -> vector<48x1xf32>
    %53 = vector.broadcast %52 : vector<48x1xf32> to vector<48x48xf32>
    %54 = arith.mulf %49, %53 : vector<48x48xf32>
    %55 = arith.truncf %54 : vector<48x48xf32> to vector<48x48xbf16>
    %56 = arith.truncf %40 : vector<48x32xf32> to vector<48x32xbf16>
    %cst_23 = arith.constant dense<0.000000e+00> : vector<48x32xf32>
    %57 = tpu.matmul %55, %56, %cst_23 {dimension_numbers = #tpu.dot_dimension_numbers<[1], [0], [0], [1], [0, 0, 1, 1], [], []>} : vector<48x48xbf16>, vector<48x32xbf16>, vector<48x32xf32> -> vector<48x32xf32>
    %58 = vector.extract_strided_slice %36 {offsets = [0, 32], sizes = [48, 32], strides = [1, 1]} : vector<48x256xf32> to vector<48x32xf32>
    %59 = vector.extract_strided_slice %36 {offsets = [0, 96], sizes = [48, 32], strides = [1, 1]} : vector<48x256xf32> to vector<48x32xf32>
    %60 = vector.extract_strided_slice %36 {offsets = [0, 160], sizes = [48, 32], strides = [1, 1]} : vector<48x256xf32> to vector<48x32xf32>
    %61 = arith.truncf %58 : vector<48x32xf32> to vector<48x32xbf16>
    %62 = arith.truncf %59 : vector<48x32xf32> to vector<48x32xbf16>
    %cst_24 = arith.constant dense<0.000000e+00> : vector<48x48xf32>
    %63 = tpu.matmul %61, %62, %cst_24 {dimension_numbers = #tpu.dot_dimension_numbers<[1], [1], [0], [0], [0, 0, 1, 0], [], []>} : vector<48x32xbf16>, vector<48x32xbf16>, vector<48x48xf32> -> vector<48x48xf32>
    %64 = arith.addf %63, %37 : vector<48x48xf32>
    %cst_25 = arith.constant dense<0xFF800000> : vector<48xf32>
    %65 = vector.multi_reduction <maximumf>, %64, %cst_25 [1] : vector<48x48xf32> to vector<48xf32>
    %66 = vector.shape_cast %65 : vector<48xf32> to vector<48x1xf32>
    %67 = vector.broadcast %66 : vector<48x1xf32> to vector<48x48xf32>
    %68 = arith.subf %64, %67 : vector<48x48xf32>
    %69 = math.exp %68 : vector<48x48xf32>
    %cst_26 = arith.constant dense<0.000000e+00> : vector<48xf32>
    %70 = vector.multi_reduction <add>, %69, %cst_26 [1] : vector<48x48xf32> to vector<48xf32>
    %71 = vector.shape_cast %70 : vector<48xf32> to vector<48x1xf32>
    %72 = tpu.reciprocal %71 {approx = true} : vector<48x1xf32> -> vector<48x1xf32>
    %73 = vector.broadcast %72 : vector<48x1xf32> to vector<48x48xf32>
    %74 = arith.mulf %69, %73 : vector<48x48xf32>
    %75 = arith.truncf %74 : vector<48x48xf32> to vector<48x48xbf16>
    %76 = arith.truncf %60 : vector<48x32xf32> to vector<48x32xbf16>
    %cst_27 = arith.constant dense<0.000000e+00> : vector<48x32xf32>
    %77 = tpu.matmul %75, %76, %cst_27 {dimension_numbers = #tpu.dot_dimension_numbers<[1], [0], [0], [1], [0, 0, 1, 1], [], []>} : vector<48x48xbf16>, vector<48x32xbf16>, vector<48x32xf32> -> vector<48x32xf32>
    %78 = tpu.concatenate %57, %77 in 1 : vector<48x32xf32>, vector<48x32xf32> -> vector<48x64xf32>
    %79 = vector.extract_strided_slice %36 {offsets = [0, 192], sizes = [48, 64], strides = [1, 1]} : vector<48x256xf32> to vector<48x64xf32>
    %80 = arith.addf %78, %79 : vector<48x64xf32>
    %81 = vector.extract_strided_slice %80 {offsets = [0, 0], sizes = [16, 64], strides = [1, 1]} : vector<48x64xf32> to vector<16x64xf32>
    %82 = vector.extract_strided_slice %80 {offsets = [16, 0], sizes = [16, 64], strides = [1, 1]} : vector<48x64xf32> to vector<16x64xf32>
    %83 = vector.extract_strided_slice %80 {offsets = [32, 0], sizes = [16, 64], strides = [1, 1]} : vector<48x64xf32> to vector<16x64xf32>
    %84 = tpu.concatenate %81, %82, %83 in 1 : vector<16x64xf32>, vector<16x64xf32>, vector<16x64xf32> -> vector<16x192xf32>
    %85 = arith.truncf %84 : vector<16x192xf32> to vector<16x192xbf16>
    %c0_28 = arith.constant 0 : index
    %c0_29 = arith.constant 0 : index
    %86 = vector.load %arg9[%c0_28, %c0_29] : memref<192x32xbf16, #tpu.memory_space<vmem>>, vector<192x32xbf16>
    %cst_30 = arith.constant dense<0.000000e+00> : vector<16x32xf32>
    %87 = tpu.matmul %85, %86, %cst_30 {dimension_numbers = #tpu.dot_dimension_numbers<[1], [0], [0], [1], [0, 0, 1, 1], [], []>} : vector<16x192xbf16>, vector<192x32xbf16>, vector<16x32xf32> -> vector<16x32xf32>
    %c0_31 = arith.constant 0 : index
    %c0_32 = arith.constant 0 : index
    %88 = vector.load %arg10[%c0_31, %c0_32] : memref<1x32xf32, #tpu.memory_space<vmem>>, vector<1x32xf32>
    %89 = vector.broadcast %88 : vector<1x32xf32> to vector<16x32xf32>
    %90 = arith.addf %87, %89 : vector<16x32xf32>
    %cst_33 = arith.constant 0.000000e+00 : f32
    %91 = vector.broadcast %cst_33 : f32 to vector<16x32xf32>
    %92 = arith.maximumf %90, %91 : vector<16x32xf32>
    %93 = arith.truncf %92 : vector<16x32xf32> to vector<16x32xbf16>
    %c0_34 = arith.constant 0 : index
    %c0_35 = arith.constant 0 : index
    %94 = vector.load %arg11[%c0_34, %c0_35] : memref<32x128xbf16, #tpu.memory_space<vmem>>, vector<32x128xbf16>
    %cst_36 = arith.constant dense<0.000000e+00> : vector<16x128xf32>
    %95 = tpu.matmul %93, %94, %cst_36 {dimension_numbers = #tpu.dot_dimension_numbers<[1], [0], [0], [1], [0, 0, 1, 1], [], []>} : vector<16x32xbf16>, vector<32x128xbf16>, vector<16x128xf32> -> vector<16x128xf32>
    %c0_37 = arith.constant 0 : index
    %c0_38 = arith.constant 0 : index
    %96 = vector.load %arg12[%c0_37, %c0_38] : memref<1x128xf32, #tpu.memory_space<vmem>>, vector<1x128xf32>
    %97 = vector.broadcast %96 : vector<1x128xf32> to vector<16x128xf32>
    %98 = arith.addf %95, %97 : vector<16x128xf32>
    %c0_39 = arith.constant 0 : index
    %c0_40 = arith.constant 0 : index
    %99 = vector.load %arg13[%c0_39, %c0_40] : memref<16x128xf32, #tpu.memory_space<vmem>>, vector<16x128xf32>
    tpu.vector_store %arg13[%c0_39, %c0_40], %98 {strides = array<i32>} : memref<16x128xf32, #tpu.memory_space<vmem>>, vector<16x128xf32>,
    return
  }
}

</mosaic_0001>

<llo_original>
// kernel: forward.1
$region0: #{forward.1}
  #allocation0 [shape = 'u32[]', space=smem, size = 0x4, offset = 0x4, fixed_abs, tag = 'smem constant byte address 0x4 - core index']
  #allocation1 [shape = 'u32[72,128]{1,0:T(1,128)}', space=vmem, size = 0x9000, scoped, tag = 'internal scratch']
  %s0 = inlined_call_operand.vmem [shape: bf16[48,72], index: 0, kind: input, shape index: {}]
  %s1 = inlined_call_operand.vmem [shape: f32[48,32], index: 1, kind: input, shape index: {}]
  %s2 = inlined_call_operand.vmem [shape: bf16[48,768], index: 2, kind: input, shape index: {}]
  %s3 = inlined_call_operand.vmem [shape: f32[48,48], index: 3, kind: input, shape index: {}]
  %s4 = inlined_call_operand.vmem [shape: bf16[72,32], index: 4, kind: input, shape index: {}]
  %s5 = inlined_call_operand.vmem [shape: bf16[32,512], index: 5, kind: input, shape index: {}]
  %s6 = inlined_call_operand.vmem [shape: f32[1,32], index: 6, kind: input, shape index: {}, may-alias: {6,10}]
  %s7 = inlined_call_operand.vmem [shape: bf16[32,256], index: 7, kind: input, shape index: {}]
  %s8 = inlined_call_operand.vmem [shape: f32[1,256], index: 8, kind: input, shape index: {}]
  %s9 = inlined_call_operand.vmem [shape: bf16[192,32], index: 9, kind: input, shape index: {}]
  %s10 = inlined_call_operand.vmem [shape: f32[1,32], index: 10, kind: input, shape index: {}, may-alias: {6,10}]
  %s11 = inlined_call_operand.vmem [shape: bf16[32,128], index: 11, kind: input, shape index: {}]
  %s12 = inlined_call_operand.vmem [shape: f32[1,128], index: 12, kind: input, shape index: {}]
  %s13 = inlined_call_operand.vmem [shape: f32[16,128], index: 13, kind: output, shape index: {}]
  %s14 = sld [smem:[#allocation0]]
  $region62: #{forward.1} parent=0
    _
  %s16 = ssub.s32 1, %s14
  %s17 = scalar_select 0, %s16, %s14
  // Predicated region
  $region2: #{forward.1} parent=0 // pred_check
    _
  $region3: #{forward.1} parent=0 // pred_check_branch
    %19 = sbr.rel (0) target = $region5
  $region4: #{forward.1} parent=0 // pred_region
    _
  $region5: #{forward.1} parent=0 // pred_fallthru
    _
  // Predicated region
  $region6: #{forward.1} parent=0 // pred_check
    _
  $region7: #{forward.1} parent=0 // pred_check_branch
    %21 = sbr.rel (0) target = $region9
  $region8: #{forward.1} parent=0 // pred_region
    _
  $region9: #{forward.1} parent=0 // pred_fallthru
    _
  // Predicated region
  $region10: #{forward.1} parent=0 // pred_check
    _
  $region11: #{forward.1} parent=0 // pred_check_branch
    %23 = sbr.rel (0) target = $region13
  $region12: #{forward.1} parent=0 // pred_region
    _
  $region13: #{forward.1} parent=0 // pred_fallthru
    _
  // Predicated region
  $region14: #{forward.1} parent=0 // pred_check
    _
  $region15: #{forward.1} parent=0 // pred_check_branch
    %25 = sbr.rel (0) target = $region17
  $region16: #{forward.1} parent=0 // pred_region
    _
  $region17: #{forward.1} parent=0 // pred_fallthru
    _
  // Predicated region
  $region18: #{forward.1} parent=0 // pred_check
    _
  $region19: #{forward.1} parent=0 // pred_check_branch
    %27 = sbr.rel (0) target = $region21
  $region20: #{forward.1} parent=0 // pred_region
    _
  $region21: #{forward.1} parent=0 // pred_fallthru
    _
  // Predicated region
  $region22: #{forward.1} parent=0 // pred_check
    _
  $region23: #{forward.1} parent=0 // pred_check_branch
    %29 = sbr.rel (0) target = $region25
  $region24: #{forward.1} parent=0 // pred_region
    _
  $region25: #{forward.1} parent=0 // pred_fallthru
    _
  // Predicated region
  $region26: #{forward.1} parent=0 // pred_check
    _
  $region27: #{forward.1} parent=0 // pred_check_branch
    %31 = sbr.rel (0) target = $region29
  $region28: #{forward.1} parent=0 // pred_region
    _
  $region29: #{forward.1} parent=0 // pred_fallthru
    _
  // Predicated region
  $region30: #{forward.1} parent=0 // pred_check
    _
  $region31: #{forward.1} parent=0 // pred_check_branch
    %33 = sbr.rel (0) target = $region33
  $region32: #{forward.1} parent=0 // pred_region
    _
  $region33: #{forward.1} parent=0 // pred_fallthru
    _
  // Predicated region
  $region34: #{forward.1} parent=0 // pred_check
    _
  $region35: #{forward.1} parent=0 // pred_check_branch
    %35 = sbr.rel (0) target = $region37
  $region36: #{forward.1} parent=0 // pred_region
    _
  $region37: #{forward.1} parent=0 // pred_fallthru
    _
  // Predicated region
  $region38: #{forward.1} parent=0 // pred_check
    _
  $region39: #{forward.1} parent=0 // pred_check_branch
    %37 = sbr.rel (0) target = $region41
  $region40: #{forward.1} parent=0 // pred_region
    _
  $region41: #{forward.1} parent=0 // pred_fallthru
    _
  // Predicated region
  $region42: #{forward.1} parent=0 // pred_check
    _
  $region43: #{forward.1} parent=0 // pred_check_branch
    %39 = sbr.rel (0) target = $region45
  $region44: #{forward.1} parent=0 // pred_region
    _
  $region45: #{forward.1} parent=0 // pred_fallthru
    _
  // Predicated region
  $region46: #{forward.1} parent=0 // pred_check
    _
  $region47: #{forward.1} parent=0 // pred_check_branch
    %41 = sbr.rel (0) target = $region49
  $region48: #{forward.1} parent=0 // pred_region
    _
  $region49: #{forward.1} parent=0 // pred_fallthru
    _
  // Predicated region
  $region50: #{forward.1} parent=0 // pred_check
    _
  $region51: #{forward.1} parent=0 // pred_check_branch
    %43 = sbr.rel (0) target = $region53
  $region52: #{forward.1} parent=0 // pred_region
    _
  $region53: #{forward.1} parent=0 // pred_fallthru
    _
  %v45 = vld [vmem:[%s0] sm:$0xf]
  %v46 = vld [vmem:[%s0 + $0x4] sm:$0xf]
  %v47 = vld [vmem:[%s0 + $0x8] sm:$0xf]
  %v48 = vld [vmem:[%s0 + $0xc] sm:$0xf]
  %v49 = vld [vmem:[%s0 + $0x10] sm:$0xf]
  %v50 = vld [vmem:[%s0 + $0x14] sm:$0xf]
  %v51 = vld [vmem:[%s4] sm:$0xf]
  %v52 = vld [vmem:[%s4 + $0x4] sm:$0xf]
  %v53 = vld [vmem:[%s4 + $0x8] sm:$0xf]
  %v54 = vld [vmem:[%s4 + $0xc] sm:$0xf]
  %v55 = vld [vmem:[%s4 + $0x10] sm:$0xf]
  %v56 = vld [vmem:[%s4 + $0x14] sm:$0xf]
  %v57 = vld [vmem:[%s4 + $0x18] sm:$0xf]
  %v58 = vld [vmem:[%s4 + $0x1c] sm:$0xf]
  %v59 = vld [vmem:[%s4 + $0x20] sm:$0xf]
  %v60 = vld [vmem:[%s1] sm:$0xff]
  %v61 = vld [vmem:[%s1 + $0x8] sm:$0xff]
  %v62 = vld [vmem:[%s1 + $0x10] sm:$0xff]
  %v63 = vld [vmem:[%s1 + $0x18] sm:$0xff]
  %v64 = vld [vmem:[%s1 + $0x20] sm:$0xff]
  %v65 = vld [vmem:[%s1 + $0x28] sm:$0xff]
  %v72 = vunpack.c.l.b16 %v45
  %v73 = vunpack.c.l.b16 %v46
  %v74 = vunpack.c.l.b16 %v47
  %v75 = vunpack.c.l.b16 %v48
  %v76 = vunpack.c.l.b16 %v49
  %v77 = vunpack.c.l.b16 %v50
  %v78 = vpack.c.b16 %v73, %v72
  %v79 = vpack.c.b16 %v75, %v74
  %v80 = vpack.c.b16 %v77, %v76
  %v90 = vunpack.c.l.b16 %v51
  %v91 = vunpack.c.l.b16 %v52
  %v92 = vunpack.c.l.b16 %v53
  %v93 = vunpack.c.l.b16 %v54
  %v94 = vunpack.c.l.b16 %v55
  %v95 = vunpack.c.l.b16 %v56
  %v96 = vunpack.c.l.b16 %v57
  %v97 = vunpack.c.l.b16 %v58
  %v98 = vunpack.c.l.b16 %v59
  %v99 = vpack.c.b16 %v91, %v90
  %v100 = vpack.c.b16 %v93, %v92
  %v101 = vpack.c.b16 %v95, %v94
  %v102 = vpack.c.b16 %v97, %v96
  %v103 = vpack.c.b16 %v98, %v98
  %vm108 = vcmask 588800
  %v110 = vsel %vm108, %v78, 0
  %v113 = vsel %vm108, %v79, 0
  %v116 = vsel %vm108, %v80, 0
  %vm118 = vcmask 1043456
  %v120 = vsel %vm118, %v103, 0
  %122 = vmatpush.bf16.msra.mxu0 0
  %123 = vmatpush.bf16.msra.mxu0 0
  %124 = vmatpush.bf16.msra.mxu0 0
  %125 = vmatpush.bf16.msra.mxu0 %v120
  %126 = vmatpush.bf16.msra.mxu0 %v102
  %127 = vmatpush.bf16.msra.mxu0 %v101
  %128 = vmatpush.bf16.msra.mxu0 %v100
  %129 = vmatpush.bf16.msra.mxu0 %v99
  %130 = vmatmul.bf16.gmra.mxu0 %v110
  %v131 = vpop.f32.mrf.mxu0
  %v132 = vadd.f32 %v60, %v131
  %v133 = vpop.f32.mrf.mxu0
  %v134 = vadd.f32 %v61, %v133
  %135 = vmatmul.bf16.gmra.mxu0 %v113
  %v136 = vpop.f32.mrf.mxu0
  %v137 = vadd.f32 %v62, %v136
  %v138 = vpop.f32.mrf.mxu0
  %v139 = vadd.f32 %v63, %v138
  %140 = vmatmul.bf16.gmra.mxu0 %v116
  %v141 = vpop.f32.mrf.mxu0
  %v142 = vadd.f32 %v64, %v141
  %v143 = vpop.f32.mrf.mxu0
  %v144 = vadd.f32 %v65, %v143
  %145 = vdwg.mxu0
  %v146 = vpack.c.bf16 %v134, %v132
  %v147 = vpack.c.bf16 %v139, %v137
  %v148 = vpack.c.bf16 %v144, %v142
  %v149 = vld [vmem:[%s5] sm:$0xff]
  %v150 = vld [vmem:[%s5 + $0x8] sm:$0xff]
  %v151 = vld [vmem:[%s5 + $0x10] sm:$0xff]
  %v152 = vld [vmem:[%s5 + $0x18] sm:$0xff]
  %v153 = vld [vmem:[%s5 + $0x20] sm:$0xff]
  %v154 = vld [vmem:[%s5 + $0x28] sm:$0xff]
  %v155 = vld [vmem:[%s5 + $0x30] sm:$0xff]
  %v156 = vld [vmem:[%s5 + $0x38] sm:$0xff]
  %v165 = vunpack.c.l.b16 %v149
  %v166 = vunpack.c.h.b16 %v149
  %v167 = vunpack.c.l.b16 %v150
  %v168 = vunpack.c.h.b16 %v150
  %v169 = vunpack.c.l.b16 %v151
  %v170 = vunpack.c.h.b16 %v151
  %v171 = vunpack.c.l.b16 %v152
  %v172 = vunpack.c.h.b16 %v152
  %v173 = vunpack.c.l.b16 %v153
  %v174 = vunpack.c.h.b16 %v153
  %v175 = vunpack.c.l.b16 %v154
  %v176 = vunpack.c.h.b16 %v154
  %v177 = vunpack.c.l.b16 %v155
  %v178 = vunpack.c.h.b16 %v155
  %v179 = vunpack.c.l.b16 %v156
  %v180 = vunpack.c.h.b16 %v156
  %v181 = vpack.c.b16 %v169, %v165
  %v182 = vpack.c.b16 %v170, %v166
  %v183 = vpack.c.b16 %v171, %v167
  %v184 = vpack.c.b16 %v172, %v168
  %v185 = vpack.c.b16 %v177, %v173
  %v186 = vpack.c.b16 %v178, %v174
  %v187 = vpack.c.b16 %v179, %v175
  %v188 = vpack.c.b16 %v180, %v176
  %vm197 = vcmask 261120
  %v199 = vsel %vm197, %v146, 0
  %v202 = vsel %vm197, %v147, 0
  %v205 = vsel %vm197, %v148, 0
  %207 = vmatpush.bf16.msra.mxu0 0
  %208 = vmatpush.bf16.msra.mxu0 0
  %209 = vmatpush.bf16.msra.mxu0 0
  %210 = vmatpush.bf16.msra.mxu0 0
  %211 = vmatpush.bf16.msra.mxu0 0
  %212 = vmatpush.bf16.msra.mxu0 0
  %213 = vmatpush.bf16.msra.mxu0 %v185
  %214 = vmatpush.bf16.msra.mxu0 %v181
  %215 = vmatmul.bf16.gmra.mxu0 %v199
  %v216 = vpop.f32.mrf.mxu0
  %v217 = vadd.f32 0.0, %v216
  %v218 = vpop.f32.mrf.mxu0
  %v219 = vadd.f32 0.0, %v218
  %220 = vmatmul.bf16.gmra.mxu0 %v202
  %v221 = vpop.f32.mrf.mxu0
  %v222 = vadd.f32 0.0, %v221
  %v223 = vpop.f32.mrf.mxu0
  %v224 = vadd.f32 0.0, %v223
  %225 = vmatmul.bf16.gmra.mxu0 %v205
  %v226 = vpop.f32.mrf.mxu0
  %v227 = vadd.f32 0.0, %v226
  %v228 = vpop.f32.mrf.mxu0
  %v229 = vadd.f32 0.0, %v228
  %230 = vdwg.mxu0
  %231 = vmatpush.bf16.msra.mxu0 0
  %232 = vmatpush.bf16.msra.mxu0 0
  %233 = vmatpush.bf16.msra.mxu0 0
  %234 = vmatpush.bf16.msra.mxu0 0
  %235 = vmatpush.bf16.msra.mxu0 0
  %236 = vmatpush.bf16.msra.mxu0 0
  %237 = vmatpush.bf16.msra.mxu0 %v186
  %238 = vmatpush.bf16.msra.mxu0 %v182
  %239 = vmatmul.bf16.gmra.mxu0 %v199
  %v240 = vpop.f32.mrf.mxu0
  %v241 = vadd.f32 0.0, %v240
  %v242 = vpop.f32.mrf.mxu0
  %v243 = vadd.f32 0.0, %v242
  %244 = vmatmul.bf16.gmra.mxu0 %v202
  %v245 = vpop.f32.mrf.mxu0
  %v246 = vadd.f32 0.0, %v245
  %v247 = vpop.f32.mrf.mxu0
  %v248 = vadd.f32 0.0, %v247
  %249 = vmatmul.bf16.gmra.mxu0 %v205
  %v250 = vpop.f32.mrf.mxu0
  %v251 = vadd.f32 0.0, %v250
  %v252 = vpop.f32.mrf.mxu0
  %v253 = vadd.f32 0.0, %v252
  %254 = vdwg.mxu0
  %255 = vmatpush.bf16.msra.mxu0 0
  %256 = vmatpush.bf16.msra.mxu0 0
  %257 = vmatpush.bf16.msra.mxu0 0
  %258 = vmatpush.bf16.msra.mxu0 0
  %259 = vmatpush.bf16.msra.mxu0 0
  %260 = vmatpush.bf16.msra.mxu0 0
  %261 = vmatpush.bf16.msra.mxu0 %v187
  %262 = vmatpush.bf16.msra.mxu0 %v183
  %263 = vmatmul.bf16.gmra.mxu0 %v199
  %v264 = vpop.f32.mrf.mxu0
  %v265 = vadd.f32 0.0, %v264
  %v266 = vpop.f32.mrf.mxu0
  %v267 = vadd.f32 0.0, %v266
  %268 = vmatmul.bf16.gmra.mxu0 %v202
  %v269 = vpop.f32.mrf.mxu0
  %v270 = vadd.f32 0.0, %v269
  %v271 = vpop.f32.mrf.mxu0
  %v272 = vadd.f32 0.0, %v271
  %273 = vmatmul.bf16.gmra.mxu0 %v205
  %v274 = vpop.f32.mrf.mxu0
  %v275 = vadd.f32 0.0, %v274
  %v276 = vpop.f32.mrf.mxu0
  %v277 = vadd.f32 0.0, %v276
  %278 = vdwg.mxu0
  %279 = vmatpush.bf16.msra.mxu0 0
  %280 = vmatpush.bf16.msra.mxu0 0
  %281 = vmatpush.bf16.msra.mxu0 0
  %282 = vmatpush.bf16.msra.mxu0 0
  %283 = vmatpush.bf16.msra.mxu0 0
  %284 = vmatpush.bf16.msra.mxu0 0
  %285 = vmatpush.bf16.msra.mxu0 %v188
  %286 = vmatpush.bf16.msra.mxu0 %v184
  %287 = vmatmul.bf16.gmra.mxu0 %v199
  %v288 = vpop.f32.mrf.mxu0
  %v289 = vadd.f32 0.0, %v288
  %v290 = vpop.f32.mrf.mxu0
  %v291 = vadd.f32 0.0, %v290
  %292 = vmatmul.bf16.gmra.mxu0 %v202
  %v293 = vpop.f32.mrf.mxu0
  %v294 = vadd.f32 0.0, %v293
  %v295 = vpop.f32.mrf.mxu0
  %v296 = vadd.f32 0.0, %v295
  %297 = vmatmul.bf16.gmra.mxu0 %v205
  %v298 = vpop.f32.mrf.mxu0
  %v299 = vadd.f32 0.0, %v298
  %v300 = vpop.f32.mrf.mxu0
  %v301 = vadd.f32 0.0, %v300
  %302 = vdwg.mxu0
  %v303 = vpack.c.bf16 %v241, %v217
  %v304 = vpack.c.bf16 %v289, %v265
  %v305 = vpack.c.bf16 %v243, %v219
  %v306 = vpack.c.bf16 %v291, %v267
  %v307 = vpack.c.bf16 %v246, %v222
  %v308 = vpack.c.bf16 %v294, %v270
  %v309 = vpack.c.bf16 %v248, %v224
  %v310 = vpack.c.bf16 %v296, %v272
  %v311 = vpack.c.bf16 %v251, %v227
  %v312 = vpack.c.bf16 %v299, %v275
  %v313 = vpack.c.bf16 %v253, %v229
  %v314 = vpack.c.bf16 %v301, %v277
  %v321 = vunpack.c.l.b16 %v303
  %v322 = vunpack.c.l.b16 %v305
  %v323 = vunpack.c.l.b16 %v307
  %v324 = vunpack.c.l.b16 %v309
  %v325 = vunpack.c.l.b16 %v311
  %v326 = vunpack.c.l.b16 %v313
  %v327 = vpack.c.b16 %v322, %v321
  %v328 = vpack.c.b16 %v324, %v323
  %v329 = vpack.c.b16 %v326, %v325
  %333 = vrot.lane.b32.xlu0 %v327, 96
  %v334 = vpop.permute.xlu0 %333
  %335 = vrot.lane.b32.xlu0 %v328, 96
  %v336 = vpop.permute.xlu0 %335
  %337 = vrot.lane.b32.xlu0 %v329, 96
  %v338 = vpop.permute.xlu0 %337
  %342 = vrot.lane.b32.xlu0 %v327, 64
  %v343 = vpop.permute.xlu0 %342
  %344 = vrot.lane.b32.xlu0 %v328, 64
  %v345 = vpop.permute.xlu0 %344
  %346 = vrot.lane.b32.xlu0 %v329, 64
  %v347 = vpop.permute.xlu0 %346
  %351 = vrot.lane.b32.xlu0 %v327, 32
  %v352 = vpop.permute.xlu0 %351
  %353 = vrot.lane.b32.xlu0 %v328, 32
  %v354 = vpop.permute.xlu0 %353
  %355 = vrot.lane.b32.xlu0 %v329, 32
  %v356 = vpop.permute.xlu0 %355
  %v360 = vunpack.c.h.b16 %v303
  %v361 = vunpack.c.h.b16 %v305
  %v362 = vunpack.c.h.b16 %v307
  %v363 = vunpack.c.h.b16 %v309
  %v364 = vunpack.c.h.b16 %v311
  %v365 = vunpack.c.h.b16 %v313
  %v366 = vpack.c.b16 %v361, %v360
  %v367 = vpack.c.b16 %v363, %v362
  %v368 = vpack.c.b16 %v365, %v364
  %372 = vrot.lane.b32.xlu0 %v366, 96
  %v373 = vpop.permute.xlu0 %372
  %374 = vrot.lane.b32.xlu0 %v367, 96
  %v375 = vpop.permute.xlu0 %374
  %376 = vrot.lane.b32.xlu0 %v368, 96
  %v377 = vpop.permute.xlu0 %376
  %381 = vrot.lane.b32.xlu0 %v366, 64
  %v382 = vpop.permute.xlu0 %381
  %383 = vrot.lane.b32.xlu0 %v367, 64
  %v384 = vpop.permute.xlu0 %383
  %385 = vrot.lane.b32.xlu0 %v368, 64
  %v386 = vpop.permute.xlu0 %385
  %390 = vrot.lane.b32.xlu0 %v366, 32
  %v391 = vpop.permute.xlu0 %390
  %392 = vrot.lane.b32.xlu0 %v367, 32
  %v393 = vpop.permute.xlu0 %392
  %394 = vrot.lane.b32.xlu0 %v368, 32
  %v395 = vpop.permute.xlu0 %394
  %v405 = vunpack.c.l.b16 %v304
  %v406 = vunpack.c.l.b16 %v306
  %v407 = vunpack.c.l.b16 %v308
  %v408 = vunpack.c.l.b16 %v310
  %v409 = vunpack.c.l.b16 %v312
  %v410 = vunpack.c.l.b16 %v314
  %v411 = vpack.c.b16 %v406, %v405
  %v412 = vpack.c.b16 %v408, %v407
  %v413 = vpack.c.b16 %v410, %v409
  %417 = vrot.lane.b32.xlu0 %v411, 96
  %v418 = vpop.permute.xlu0 %417
  %419 = vrot.lane.b32.xlu0 %v412, 96
  %v420 = vpop.permute.xlu0 %419
  %421 = vrot.lane.b32.xlu0 %v413, 96
  %v422 = vpop.permute.xlu0 %421
  %426 = vrot.lane.b32.xlu0 %v411, 64
  %v427 = vpop.permute.xlu0 %426
  %428 = vrot.lane.b32.xlu0 %v412, 64
  %v429 = vpop.permute.xlu0 %428
  %430 = vrot.lane.b32.xlu0 %v413, 64
  %v431 = vpop.permute.xlu0 %430
  %435 = vrot.lane.b32.xlu0 %v411, 32
  %v436 = vpop.permute.xlu0 %435
  %437 = vrot.lane.b32.xlu0 %v412, 32
  %v438 = vpop.permute.xlu0 %437
  %439 = vrot.lane.b32.xlu0 %v413, 32
  %v440 = vpop.permute.xlu0 %439
  %v444 = vunpack.c.h.b16 %v304
  %v445 = vunpack.c.h.b16 %v306
  %v446 = vunpack.c.h.b16 %v308
  %v447 = vunpack.c.h.b16 %v310
  %v448 = vunpack.c.h.b16 %v312
  %v449 = vunpack.c.h.b16 %v314
  %v450 = vpack.c.b16 %v445, %v444
  %v451 = vpack.c.b16 %v447, %v446
  %v452 = vpack.c.b16 %v449, %v448
  %456 = vrot.lane.b32.xlu0 %v450, 96
  %v457 = vpop.permute.xlu0 %456
  %458 = vrot.lane.b32.xlu0 %v451, 96
  %v459 = vpop.permute.xlu0 %458
  %460 = vrot.lane.b32.xlu0 %v452, 96
  %v461 = vpop.permute.xlu0 %460
  %465 = vrot.lane.b32.xlu0 %v450, 64
  %v466 = vpop.permute.xlu0 %465
  %467 = vrot.lane.b32.xlu0 %v451, 64
  %v468 = vpop.permute.xlu0 %467
  %469 = vrot.lane.b32.xlu0 %v452, 64
  %v470 = vpop.permute.xlu0 %469
  %474 = vrot.lane.b32.xlu0 %v450, 32
  %v475 = vpop.permute.xlu0 %474
  %476 = vrot.lane.b32.xlu0 %v451, 32
  %v477 = vpop.permute.xlu0 %476
  %478 = vrot.lane.b32.xlu0 %v452, 32
  %v479 = vpop.permute.xlu0 %478
  %v483 = vld [vmem:[%s2] sm:$0xff]
  %v484 = vld [vmem:[%s2 + $0x8] sm:$0xff]
  %v485 = vld [vmem:[%s2 + $0x10] sm:$0xff]
  %v486 = vld [vmem:[%s2 + $0x18] sm:$0xff]
  %v487 = vld [vmem:[%s2 + $0x20] sm:$0xff]
  %v488 = vld [vmem:[%s2 + $0x28] sm:$0xff]
  %v489 = vld [vmem:[%s2 + $0x30] sm:$0xff]
  %v490 = vld [vmem:[%s2 + $0x38] sm:$0xff]
  %v491 = vld [vmem:[%s2 + $0x40] sm:$0xff]
  %v492 = vld [vmem:[%s2 + $0x48] sm:$0xff]
  %v493 = vld [vmem:[%s2 + $0x50] sm:$0xff]
  %v494 = vld [vmem:[%s2 + $0x58] sm:$0xff]
  %v495 = vld [vmem:[%s2 + $0x60] sm:$0xff]
  %v496 = vld [vmem:[%s2 + $0x68] sm:$0xff]
  %v497 = vld [vmem:[%s2 + $0x70] sm:$0xff]
  %v498 = vld [vmem:[%s2 + $0x78] sm:$0xff]
  %v499 = vld [vmem:[%s2 + $0x80] sm:$0xff]
  %v500 = vld [vmem:[%s2 + $0x88] sm:$0xff]
  %v501 = vld [vmem:[%s6] sm:$0x1]
  %v503 = vperm.slane %v501, 0
  %v523 = vunpack.c.l.b16 %v483
  %v524 = vunpack.c.h.b16 %v483
  %v525 = vunpack.c.l.b16 %v484
  %v526 = vunpack.c.h.b16 %v484
  %v527 = vunpack.c.l.b16 %v485
  %v528 = vunpack.c.h.b16 %v485
  %v529 = vunpack.c.l.b16 %v486
  %v530 = vunpack.c.h.b16 %v486
  %v531 = vunpack.c.l.b16 %v487
  %v532 = vunpack.c.h.b16 %v487
  %v533 = vunpack.c.l.b16 %v488
  %v534 = vunpack.c.h.b16 %v488
  %v535 = vunpack.c.l.b16 %v489
  %v536 = vunpack.c.h.b16 %v489
  %v537 = vunpack.c.l.b16 %v490
  %v538 = vunpack.c.h.b16 %v490
  %v539 = vunpack.c.l.b16 %v491
  %v540 = vunpack.c.h.b16 %v491
  %v541 = vunpack.c.l.b16 %v492
  %v542 = vunpack.c.h.b16 %v492
  %v543 = vunpack.c.l.b16 %v493
  %v544 = vunpack.c.h.b16 %v493
  %v545 = vunpack.c.l.b16 %v494
  %v546 = vunpack.c.h.b16 %v494
  %v547 = vunpack.c.l.b16 %v495
  %v548 = vunpack.c.h.b16 %v495
  %v549 = vunpack.c.l.b16 %v496
  %v550 = vunpack.c.h.b16 %v496
  %v551 = vunpack.c.l.b16 %v497
  %v552 = vunpack.c.h.b16 %v497
  %v553 = vunpack.c.l.b16 %v498
  %v554 = vunpack.c.h.b16 %v498
  %v555 = vunpack.c.l.b16 %v499
  %v556 = vunpack.c.h.b16 %v499
  %v557 = vunpack.c.l.b16 %v500
  %v558 = vunpack.c.h.b16 %v500
  %v559 = vpack.c.b16 %v529, %v523
  %v560 = vpack.c.b16 %v530, %v524
  %v561 = vpack.c.b16 %v531, %v525
  %v562 = vpack.c.b16 %v532, %v526
  %v563 = vpack.c.b16 %v533, %v527
  %v564 = vpack.c.b16 %v534, %v528
  %v565 = vpack.c.b16 %v541, %v535
  %v566 = vpack.c.b16 %v542, %v536
  %v567 = vpack.c.b16 %v543, %v537
  %v568 = vpack.c.b16 %v544, %v538
  %v569 = vpack.c.b16 %v545, %v539
  %v570 = vpack.c.b16 %v546, %v540
  %v571 = vpack.c.b16 %v553, %v547
  %v572 = vpack.c.b16 %v554, %v548
  %v573 = vpack.c.b16 %v555, %v549
  %v574 = vpack.c.b16 %v556, %v550
  %v575 = vpack.c.b16 %v557, %v551
  %v576 = vpack.c.b16 %v558, %v552
  %595 = vmatpush.bf16.msra.mxu0 %v345
  %596 = vmatpush.bf16.msra.mxu0 %v343
  %597 = vmatpush.bf16.msra.mxu0 %v338
  %598 = vmatpush.bf16.msra.mxu0 %v336
  %599 = vmatpush.bf16.msra.mxu0 %v334
  %600 = vmatpush.bf16.msra.mxu0 %v329
  %601 = vmatpush.bf16.msra.mxu0 %v328
  %602 = vmatpush.bf16.msra.mxu0 %v327
  %603 = vmatmul.bf16.gmra.mxu0 %v559
  %v604 = vpop.f32.mrf.mxu0
  %v605 = vadd.f32 %v503, %v604
  %v606 = vpop.f32.mrf.mxu0
  %v607 = vadd.f32 %v503, %v606
  %608 = vmatmul.bf16.gmra.mxu0 %v565
  %v609 = vpop.f32.mrf.mxu0
  %v610 = vadd.f32 %v503, %v609
  %v611 = vpop.f32.mrf.mxu0
  %v612 = vadd.f32 %v503, %v611
  %613 = vmatmul.bf16.gmra.mxu0 %v571
  %v614 = vpop.f32.mrf.mxu0
  %v615 = vadd.f32 %v503, %v614
  %v616 = vpop.f32.mrf.mxu0
  %v617 = vadd.f32 %v503, %v616
  %618 = vdwg.mxu0
  %619 = vmatpush.bf16.msra.mxu0 %v373
  %620 = vmatpush.bf16.msra.mxu0 %v368
  %621 = vmatpush.bf16.msra.mxu0 %v367
  %622 = vmatpush.bf16.msra.mxu0 %v366
  %623 = vmatpush.bf16.msra.mxu0 %v356
  %624 = vmatpush.bf16.msra.mxu0 %v354
  %625 = vmatpush.bf16.msra.mxu0 %v352
  %626 = vmatpush.bf16.msra.mxu0 %v347
  %627 = vmatmul.bf16.gmra.mxu0 %v560
  %v628 = vpop.f32.mrf.mxu0
  %v629 = vadd.f32 %v605, %v628
  %v630 = vpop.f32.mrf.mxu0
  %v631 = vadd.f32 %v607, %v630
  %632 = vmatmul.bf16.gmra.mxu0 %v566
  %v633 = vpop.f32.mrf.mxu0
  %v634 = vadd.f32 %v610, %v633
  %v635 = vpop.f32.mrf.mxu0
  %v636 = vadd.f32 %v612, %v635
  %637 = vmatmul.bf16.gmra.mxu0 %v572
  %v638 = vpop.f32.mrf.mxu0
  %v639 = vadd.f32 %v615, %v638
  %v640 = vpop.f32.mrf.mxu0
  %v641 = vadd.f32 %v617, %v640
  %642 = vdwg.mxu0
  %643 = vmatpush.bf16.msra.mxu0 %v395
  %644 = vmatpush.bf16.msra.mxu0 %v393
  %645 = vmatpush.bf16.msra.mxu0 %v391
  %646 = vmatpush.bf16.msra.mxu0 %v386
  %647 = vmatpush.bf16.msra.mxu0 %v384
  %648 = vmatpush.bf16.msra.mxu0 %v382
  %649 = vmatpush.bf16.msra.mxu0 %v377
  %650 = vmatpush.bf16.msra.mxu0 %v375
  %651 = vmatmul.bf16.gmra.mxu0 %v561
  %v652 = vpop.f32.mrf.mxu0
  %v653 = vadd.f32 %v629, %v652
  %v654 = vpop.f32.mrf.mxu0
  %v655 = vadd.f32 %v631, %v654
  %656 = vmatmul.bf16.gmra.mxu0 %v567
  %v657 = vpop.f32.mrf.mxu0
  %v658 = vadd.f32 %v634, %v657
  %v659 = vpop.f32.mrf.mxu0
  %v660 = vadd.f32 %v636, %v659
  %661 = vmatmul.bf16.gmra.mxu0 %v573
  %v662 = vpop.f32.mrf.mxu0
  %v663 = vadd.f32 %v639, %v662
  %v664 = vpop.f32.mrf.mxu0
  %v665 = vadd.f32 %v641, %v664
  %666 = vdwg.mxu0
  %667 = vmatpush.bf16.msra.mxu0 %v429
  %668 = vmatpush.bf16.msra.mxu0 %v427
  %669 = vmatpush.bf16.msra.mxu0 %v422
  %670 = vmatpush.bf16.msra.mxu0 %v420
  %671 = vmatpush.bf16.msra.mxu0 %v418
  %672 = vmatpush.bf16.msra.mxu0 %v413
  %673 = vmatpush.bf16.msra.mxu0 %v412
  %674 = vmatpush.bf16.msra.mxu0 %v411
  %675 = vmatmul.bf16.gmra.mxu0 %v562
  %v676 = vpop.f32.mrf.mxu0
  %v677 = vadd.f32 %v653, %v676
  %v678 = vpop.f32.mrf.mxu0
  %v679 = vadd.f32 %v655, %v678
  %680 = vmatmul.bf16.gmra.mxu0 %v568
  %v681 = vpop.f32.mrf.mxu0
  %v682 = vadd.f32 %v658, %v681
  %v683 = vpop.f32.mrf.mxu0
  %v684 = vadd.f32 %v660, %v683
  %685 = vmatmul.bf16.gmra.mxu0 %v574
  %v686 = vpop.f32.mrf.mxu0
  %v687 = vadd.f32 %v663, %v686
  %v688 = vpop.f32.mrf.mxu0
  %v689 = vadd.f32 %v665, %v688
  %690 = vdwg.mxu0
  %691 = vmatpush.bf16.msra.mxu0 %v457
  %692 = vmatpush.bf16.msra.mxu0 %v452
  %693 = vmatpush.bf16.msra.mxu0 %v451
  %694 = vmatpush.bf16.msra.mxu0 %v450
  %695 = vmatpush.bf16.msra.mxu0 %v440
  %696 = vmatpush.bf16.msra.mxu0 %v438
  %697 = vmatpush.bf16.msra.mxu0 %v436
  %698 = vmatpush.bf16.msra.mxu0 %v431
  %699 = vmatmul.bf16.gmra.mxu0 %v563
  %v700 = vpop.f32.mrf.mxu0
  %v701 = vadd.f32 %v677, %v700
  %v702 = vpop.f32.mrf.mxu0
  %v703 = vadd.f32 %v679, %v702
  %704 = vmatmul.bf16.gmra.mxu0 %v569
  %v705 = vpop.f32.mrf.mxu0
  %v706 = vadd.f32 %v682, %v705
  %v707 = vpop.f32.mrf.mxu0
  %v708 = vadd.f32 %v684, %v707
  %709 = vmatmul.bf16.gmra.mxu0 %v575
  %v710 = vpop.f32.mrf.mxu0
  %v711 = vadd.f32 %v687, %v710
  %v712 = vpop.f32.mrf.mxu0
  %v713 = vadd.f32 %v689, %v712
  %714 = vdwg.mxu0
  %715 = vmatpush.bf16.msra.mxu0 %v479
  %716 = vmatpush.bf16.msra.mxu0 %v477
  %717 = vmatpush.bf16.msra.mxu0 %v475
  %718 = vmatpush.bf16.msra.mxu0 %v470
  %719 = vmatpush.bf16.msra.mxu0 %v468
  %720 = vmatpush.bf16.msra.mxu0 %v466
  %721 = vmatpush.bf16.msra.mxu0 %v461
  %722 = vmatpush.bf16.msra.mxu0 %v459
  %723 = vmatmul.bf16.gmra.mxu0 %v564
  %v724 = vpop.f32.mrf.mxu0
  %v725 = vadd.f32 %v701, %v724
  %v726 = vpop.f32.mrf.mxu0
  %v727 = vadd.f32 %v703, %v726
  %728 = vmatmul.bf16.gmra.mxu0 %v570
  %v729 = vpop.f32.mrf.mxu0
  %v730 = vadd.f32 %v706, %v729
  %v731 = vpop.f32.mrf.mxu0
  %v732 = vadd.f32 %v708, %v731
  %733 = vmatmul.bf16.gmra.mxu0 %v576
  %v734 = vpop.f32.mrf.mxu0
  %v735 = vadd.f32 %v711, %v734
  %v736 = vpop.f32.mrf.mxu0
  %v737 = vadd.f32 %v713, %v736
  %738 = vdwg.mxu0
  %v739 = vpack.c.bf16 %v727, %v725
  %v740 = vpack.c.bf16 %v732, %v730
  %v741 = vpack.c.bf16 %v737, %v735
  %v742 = vld [vmem:[%s7] sm:$0xff]
  %v743 = vld [vmem:[%s7 + $0x8] sm:$0xff]
  %v744 = vld [vmem:[%s7 + $0x10] sm:$0xff]
  %v745 = vld [vmem:[%s7 + $0x18] sm:$0xff]
  %v746 = vld [vmem:[%s8] sm:$0x3]
  %v748 = vperm.slane %v746, 0
  %v749 = vperm.slane %v746, 1
  %v756 = vunpack.c.l.b16 %v742
  %v757 = vunpack.c.h.b16 %v742
  %v758 = vunpack.c.l.b16 %v743
  %v759 = vunpack.c.h.b16 %v743
  %v760 = vunpack.c.l.b16 %v744
  %v761 = vunpack.c.h.b16 %v744
  %v762 = vunpack.c.l.b16 %v745
  %v763 = vunpack.c.h.b16 %v745
  %v764 = vpack.c.b16 %v758, %v756
  %v765 = vpack.c.b16 %v759, %v757
  %v766 = vpack.c.b16 %v762, %v760
  %v767 = vpack.c.b16 %v763, %v761
  %v773 = vsel %vm197, %v739, 0
  %v776 = vsel %vm197, %v740, 0
  %v779 = vsel %vm197, %v741, 0
  %781 = vmatpush.bf16.msra.mxu0 0
  %782 = vmatpush.bf16.msra.mxu0 0
  %783 = vmatpush.bf16.msra.mxu0 0
  %784 = vmatpush.bf16.msra.mxu0 0
  %785 = vmatpush.bf16.msra.mxu0 0
  %786 = vmatpush.bf16.msra.mxu0 0
  %787 = vmatpush.bf16.msra.mxu0 %v766
  %788 = vmatpush.bf16.msra.mxu0 %v764
  %789 = vmatmul.bf16.gmra.mxu0 %v773
  %v790 = vpop.f32.mrf.mxu0
  %v791 = vadd.f32 %v748, %v790
  %v792 = vpop.f32.mrf.mxu0
  %v793 = vadd.f32 %v748, %v792
  %794 = vmatmul.bf16.gmra.mxu0 %v776
  %v795 = vpop.f32.mrf.mxu0
  %v796 = vadd.f32 %v748, %v795
  %v797 = vpop.f32.mrf.mxu0
  %v798 = vadd.f32 %v748, %v797
  %799 = vmatmul.bf16.gmra.mxu0 %v779
  %v800 = vpop.f32.mrf.mxu0
  %v801 = vadd.f32 %v748, %v800
  %v802 = vpop.f32.mrf.mxu0
  %v803 = vadd.f32 %v748, %v802
  %804 = vdwg.mxu0
  %805 = vmatpush.bf16.msra.mxu0 0
  %806 = vmatpush.bf16.msra.mxu0 0
  %807 = vmatpush.bf16.msra.mxu0 0
  %808 = vmatpush.bf16.msra.mxu0 0
  %809 = vmatpush.bf16.msra.mxu0 0
  %810 = vmatpush.bf16.msra.mxu0 0
  %811 = vmatpush.bf16.msra.mxu0 %v767
  %812 = vmatpush.bf16.msra.mxu0 %v765
  %813 = vmatmul.bf16.gmra.mxu0 %v773
  %v814 = vpop.f32.mrf.mxu0
  %v815 = vadd.f32 %v749, %v814
  %v816 = vpop.f32.mrf.mxu0
  %v817 = vadd.f32 %v749, %v816
  %818 = vmatmul.bf16.gmra.mxu0 %v776
  %v819 = vpop.f32.mrf.mxu0
  %v820 = vadd.f32 %v749, %v819
  %v821 = vpop.f32.mrf.mxu0
  %v822 = vadd.f32 %v749, %v821
  %823 = vmatmul.bf16.gmra.mxu0 %v779
  %v824 = vpop.f32.mrf.mxu0
  %v825 = vadd.f32 %v749, %v824
  %v826 = vpop.f32.mrf.mxu0
  %v827 = vadd.f32 %v749, %v826
  %828 = vdwg.mxu0
  %v829 = vld [vmem:[%s3] sm:$0xff]
  %v830 = vld [vmem:[%s3 + $0x8] sm:$0xff]
  %v831 = vld [vmem:[%s3 + $0x10] sm:$0xff]
  %v832 = vld [vmem:[%s3 + $0x18] sm:$0xff]
  %v833 = vld [vmem:[%s3 + $0x20] sm:$0xff]
  %v834 = vld [vmem:[%s3 + $0x28] sm:$0xff]
  %v835 = vpack.c.bf16 %v793, %v791
  %v836 = vpack.c.bf16 %v798, %v796
  %v837 = vpack.c.bf16 %v803, %v801
  %841 = vrot.lane.b32.xlu0 %v835, 64
  %v842 = vpop.permute.xlu0 %841
  %843 = vrot.lane.b32.xlu0 %v836, 64
  %v844 = vpop.permute.xlu0 %843
  %845 = vrot.lane.b32.xlu0 %v837, 64
  %v846 = vpop.permute.xlu0 %845
  %v848 = vsel %vm197, %v835, 0
  %v851 = vsel %vm197, %v836, 0
  %v854 = vsel %vm197, %v837, 0
  %v857 = vsel %vm197, %v842, 0
  %v860 = vsel %vm197, %v844, 0
  %v863 = vsel %vm197, %v846, 0
  %865 = vmatpush.bf16.xpose.msra.mxu0 0
  %866 = vmatpush.bf16.xpose.msra.mxu0 0
  %867 = vmatpush.bf16.xpose.msra.mxu0 0
  %868 = vmatpush.bf16.xpose.msra.mxu0 0
  %869 = vmatpush.bf16.xpose.msra.mxu0 0
  %870 = vmatpush.bf16.xpose.msra.mxu0 %v863
  %871 = vmatpush.bf16.xpose.msra.mxu0 %v860
  %872 = vmatpush.bf16.xpose.msra.mxu0 %v857
  %873 = vmatmul.bf16.gmra.mxu0 %v848
  %v874 = vpop.f32.mrf.mxu0
  %v875 = vadd.f32 %v829, %v874
  %v876 = vpop.f32.mrf.mxu0
  %v877 = vadd.f32 %v830, %v876
  %878 = vmatmul.bf16.gmra.mxu0 %v851
  %v879 = vpop.f32.mrf.mxu0
  %v880 = vadd.f32 %v831, %v879
  %v881 = vpop.f32.mrf.mxu0
  %v882 = vadd.f32 %v832, %v881
  %883 = vmatmul.bf16.gmra.mxu0 %v854
  %v884 = vpop.f32.mrf.mxu0
  %v885 = vadd.f32 %v833, %v884
  %v886 = vpop.f32.mrf.mxu0
  %v887 = vadd.f32 %v834, %v886
  %888 = vdwg.mxu0
  %vm889 = vcmask 392192
  %v890 = vsel %vm889, %v875, -inf
  %891 = vmax.xlane.f32.xlu0 %v890
  %v892 = vpop.xlane.xlu0 %891
  %v893 = vsel %vm889, %v877, -inf
  %894 = vmax.xlane.f32.xlu0 %v893
  %v895 = vpop.xlane.xlu0 %894
  %v896 = vsel %vm889, %v880, -inf
  %897 = vmax.xlane.f32.xlu0 %v896
  %v898 = vpop.xlane.xlu0 %897
  %v899 = vsel %vm889, %v882, -inf
  %900 = vmax.xlane.f32.xlu0 %v899
  %v901 = vpop.xlane.xlu0 %900
  %v902 = vsel %vm889, %v885, -inf
  %903 = vmax.xlane.f32.xlu0 %v902
  %v904 = vpop.xlane.xlu0 %903
  %v905 = vsel %vm889, %v887, -inf
  %906 = vmax.xlane.f32.xlu0 %v905
  %v907 = vpop.xlane.xlu0 %906
  %v908 = vsub.f32 %v875, %v892
  %v909 = vsub.f32 %v877, %v895
  %v910 = vsub.f32 %v880, %v898
  %v911 = vsub.f32 %v882, %v901
  %v912 = vsub.f32 %v885, %v904
  %v913 = vsub.f32 %v887, %v907
  %v914 = vmul.f32 %v908, 1.442695
  %v915 = vpow.pop %v914
  %v916 = vmul.f32 %v909, 1.442695
  %v917 = vpow.pop %v916
  %v918 = vmul.f32 %v910, 1.442695
  %v919 = vpow.pop %v918
  %v920 = vmul.f32 %v911, 1.442695
  %v921 = vpow.pop %v920
  %v922 = vmul.f32 %v912, 1.442695
  %v923 = vpow.pop %v922
  %v924 = vmul.f32 %v913, 1.442695
  %v925 = vpow.pop %v924
  %v926 = vsel %vm889, %v915, 0.0
  %927 = vadd.xlane.f32.xlu0 %v926
  %v928 = vpop.xlane.xlu0 %927
  %v929 = vsel %vm889, %v917, 0.0
  %930 = vadd.xlane.f32.xlu0 %v929
  %v931 = vpop.xlane.xlu0 %930
  %v932 = vsel %vm889, %v919, 0.0
  %933 = vadd.xlane.f32.xlu0 %v932
  %v934 = vpop.xlane.xlu0 %933
  %v935 = vsel %vm889, %v921, 0.0
  %936 = vadd.xlane.f32.xlu0 %v935
  %v937 = vpop.xlane.xlu0 %936
  %v938 = vsel %vm889, %v923, 0.0
  %939 = vadd.xlane.f32.xlu0 %v938
  %v940 = vpop.xlane.xlu0 %939
  %v941 = vsel %vm889, %v925, 0.0
  %942 = vadd.xlane.f32.xlu0 %v941
  %v943 = vpop.xlane.xlu0 %942
  %v944 = vrcp.pop %v928
  %v945 = vrcp.pop %v931
  %v946 = vrcp.pop %v934
  %v947 = vrcp.pop %v937
  %v948 = vrcp.pop %v940
  %v949 = vrcp.pop %v943
  %v950 = vmul.f32 %v915, %v944
  %v951 = vmul.f32 %v917, %v945
  %v952 = vmul.f32 %v919, %v946
  %v953 = vmul.f32 %v921, %v947
  %v954 = vmul.f32 %v923, %v948
  %v955 = vmul.f32 %v925, %v949
  %v956 = vpack.c.bf16 %v951, %v950
  %v957 = vpack.c.bf16 %v953, %v952
  %v958 = vpack.c.bf16 %v955, %v954
  %v959 = vpack.c.bf16 %v817, %v815
  %v960 = vpack.c.bf16 %v822, %v820
  %v961 = vpack.c.bf16 %v827, %v825
  %v963 = vsel %vm889, %v956, 0
  %v966 = vsel %vm889, %v957, 0
  %v969 = vsel %vm889, %v958, 0
  %971 = vmatpush.bf16.msra.mxu0 0
  %972 = vmatpush.bf16.msra.mxu0 0
  %973 = vmatpush.bf16.msra.mxu0 0
  %974 = vmatpush.bf16.msra.mxu0 0
  %975 = vmatpush.bf16.msra.mxu0 0
  %976 = vmatpush.bf16.msra.mxu0 %v961
  %977 = vmatpush.bf16.msra.mxu0 %v960
  %978 = vmatpush.bf16.msra.mxu0 %v959
  %979 = vmatmul.bf16.gmra.mxu0 %v963
  %v980 = vpop.f32.mrf.mxu0
  %v981 = vadd.f32 0.0, %v980
  %v982 = vpop.f32.mrf.mxu0
  %v983 = vadd.f32 0.0, %v982
  %984 = vmatmul.bf16.gmra.mxu0 %v966
  %v985 = vpop.f32.mrf.mxu0
  %v986 = vadd.f32 0.0, %v985
  %v987 = vpop.f32.mrf.mxu0
  %v988 = vadd.f32 0.0, %v987
  %989 = vmatmul.bf16.gmra.mxu0 %v969
  %v990 = vpop.f32.mrf.mxu0
  %v991 = vadd.f32 0.0, %v990
  %v992 = vpop.f32.mrf.mxu0
  %v993 = vadd.f32 0.0, %v992
  %994 = vdwg.mxu0
  %995 = vrot.lane.b32.xlu0 %v835, 96
  %v996 = vpop.permute.xlu0 %995
  %997 = vrot.lane.b32.xlu0 %v836, 96
  %v998 = vpop.permute.xlu0 %997
  %999 = vrot.lane.b32.xlu0 %v837, 96
  %v1000 = vpop.permute.xlu0 %999
  %1001 = vrot.lane.b32.xlu0 %v835, 32
  %v1002 = vpop.permute.xlu0 %1001
  %1003 = vrot.lane.b32.xlu0 %v836, 32
  %v1004 = vpop.permute.xlu0 %1003
  %1005 = vrot.lane.b32.xlu0 %v837, 32
  %v1006 = vpop.permute.xlu0 %1005
  %v1008 = vsel %vm197, %v996, 0
  %v1011 = vsel %vm197, %v998, 0
  %v1014 = vsel %vm197, %v1000, 0
  %v1017 = vsel %vm197, %v1002, 0
  %v1020 = vsel %vm197, %v1004, 0
  %v1023 = vsel %vm197, %v1006, 0
  %1025 = vmatpush.bf16.xpose.msra.mxu0 0
  %1026 = vmatpush.bf16.xpose.msra.mxu0 0
  %1027 = vmatpush.bf16.xpose.msra.mxu0 0
  %1028 = vmatpush.bf16.xpose.msra.mxu0 0
  %1029 = vmatpush.bf16.xpose.msra.mxu0 0
  %1030 = vmatpush.bf16.xpose.msra.mxu0 %v1023
  %1031 = vmatpush.bf16.xpose.msra.mxu0 %v1020
  %1032 = vmatpush.bf16.xpose.msra.mxu0 %v1017
  %1033 = vmatmul.bf16.gmra.mxu0 %v1008
  %v1034 = vpop.f32.mrf.mxu0
  %v1035 = vadd.f32 %v829, %v1034
  %v1036 = vpop.f32.mrf.mxu0
  %v1037 = vadd.f32 %v830, %v1036
  %1038 = vmatmul.bf16.gmra.mxu0 %v1011
  %v1039 = vpop.f32.mrf.mxu0
  %v1040 = vadd.f32 %v831, %v1039
  %v1041 = vpop.f32.mrf.mxu0
  %v1042 = vadd.f32 %v832, %v1041
  %1043 = vmatmul.bf16.gmra.mxu0 %v1014
  %v1044 = vpop.f32.mrf.mxu0
  %v1045 = vadd.f32 %v833, %v1044
  %v1046 = vpop.f32.mrf.mxu0
  %v1047 = vadd.f32 %v834, %v1046
  %1048 = vdwg.mxu0
  %v1049 = vsel %vm889, %v1035, -inf
  %1050 = vmax.xlane.f32.xlu0 %v1049
  %v1051 = vpop.xlane.xlu0 %1050
  %v1052 = vsel %vm889, %v1037, -inf
  %1053 = vmax.xlane.f32.xlu0 %v1052
  %v1054 = vpop.xlane.xlu0 %1053
  %v1055 = vsel %vm889, %v1040, -inf
  %1056 = vmax.xlane.f32.xlu0 %v1055
  %v1057 = vpop.xlane.xlu0 %1056
  %v1058 = vsel %vm889, %v1042, -inf
  %1059 = vmax.xlane.f32.xlu0 %v1058
  %v1060 = vpop.xlane.xlu0 %1059
  %v1061 = vsel %vm889, %v1045, -inf
  %1062 = vmax.xlane.f32.xlu0 %v1061
  %v1063 = vpop.xlane.xlu0 %1062
  %v1064 = vsel %vm889, %v1047, -inf
  %1065 = vmax.xlane.f32.xlu0 %v1064
  %v1066 = vpop.xlane.xlu0 %1065
  %v1067 = vsub.f32 %v1035, %v1051
  %v1068 = vsub.f32 %v1037, %v1054
  %v1069 = vsub.f32 %v1040, %v1057
  %v1070 = vsub.f32 %v1042, %v1060
  %v1071 = vsub.f32 %v1045, %v1063
  %v1072 = vsub.f32 %v1047, %v1066
  %v1073 = vmul.f32 %v1067, 1.442695
  %v1074 = vpow.pop %v1073
  %v1075 = vmul.f32 %v1068, 1.442695
  %v1076 = vpow.pop %v1075
  %v1077 = vmul.f32 %v1069, 1.442695
  %v1078 = vpow.pop %v1077
  %v1079 = vmul.f32 %v1070, 1.442695
  %v1080 = vpow.pop %v1079
  %v1081 = vmul.f32 %v1071, 1.442695
  %v1082 = vpow.pop %v1081
  %v1083 = vmul.f32 %v1072, 1.442695
  %v1084 = vpow.pop %v1083
  %v1085 = vsel %vm889, %v1074, 0.0
  %1086 = vadd.xlane.f32.xlu0 %v1085
  %v1087 = vpop.xlane.xlu0 %1086
  %v1088 = vsel %vm889, %v1076, 0.0
  %1089 = vadd.xlane.f32.xlu0 %v1088
  %v1090 = vpop.xlane.xlu0 %1089
  %v1091 = vsel %vm889, %v1078, 0.0
  %1092 = vadd.xlane.f32.xlu0 %v1091
  %v1093 = vpop.xlane.xlu0 %1092
  %v1094 = vsel %vm889, %v1080, 0.0
  %1095 = vadd.xlane.f32.xlu0 %v1094
  %v1096 = vpop.xlane.xlu0 %1095
  %v1097 = vsel %vm889, %v1082, 0.0
  %1098 = vadd.xlane.f32.xlu0 %v1097
  %v1099 = vpop.xlane.xlu0 %1098
  %v1100 = vsel %vm889, %v1084, 0.0
  %1101 = vadd.xlane.f32.xlu0 %v1100
  %v1102 = vpop.xlane.xlu0 %1101
  %v1103 = vrcp.pop %v1087
  %v1104 = vrcp.pop %v1090
  %v1105 = vrcp.pop %v1093
  %v1106 = vrcp.pop %v1096
  %v1107 = vrcp.pop %v1099
  %v1108 = vrcp.pop %v1102
  %v1109 = vmul.f32 %v1074, %v1103
  %v1110 = vmul.f32 %v1076, %v1104
  %v1111 = vmul.f32 %v1078, %v1105
  %v1112 = vmul.f32 %v1080, %v1106
  %v1113 = vmul.f32 %v1082, %v1107
  %v1114 = vmul.f32 %v1084, %v1108
  %v1115 = vpack.c.bf16 %v1110, %v1109
  %v1116 = vpack.c.bf16 %v1112, %v1111
  %v1117 = vpack.c.bf16 %v1114, %v1113
  %1121 = vrot.lane.b32.xlu0 %v959, 96
  %v1122 = vpop.permute.xlu0 %1121
  %1123 = vrot.lane.b32.xlu0 %v960, 96
  %v1124 = vpop.permute.xlu0 %1123
  %1125 = vrot.lane.b32.xlu0 %v961, 96
  %v1126 = vpop.permute.xlu0 %1125
  %v1131 = vsel %vm889, %v1115, 0
  %v1134 = vsel %vm889, %v1116, 0
  %v1137 = vsel %vm889, %v1117, 0
  %1139 = vmatpush.bf16.msra.mxu0 0
  %1140 = vmatpush.bf16.msra.mxu0 0
  %1141 = vmatpush.bf16.msra.mxu0 0
  %1142 = vmatpush.bf16.msra.mxu0 0
  %1143 = vmatpush.bf16.msra.mxu0 0
  %1144 = vmatpush.bf16.msra.mxu0 %v1126
  %1145 = vmatpush.bf16.msra.mxu0 %v1124
  %1146 = vmatpush.bf16.msra.mxu0 %v1122
  %1147 = vmatmul.bf16.gmra.mxu0 %v1131
  %v1148 = vpop.f32.mrf.mxu0
  %v1149 = vadd.f32 0.0, %v1148
  %v1150 = vpop.f32.mrf.mxu0
  %v1151 = vadd.f32 0.0, %v1150
  %1152 = vmatmul.bf16.gmra.mxu0 %v1134
  %v1153 = vpop.f32.mrf.mxu0
  %v1154 = vadd.f32 0.0, %v1153
  %v1155 = vpop.f32.mrf.mxu0
  %v1156 = vadd.f32 0.0, %v1155
  %1157 = vmatmul.bf16.gmra.mxu0 %v1137
  %v1158 = vpop.f32.mrf.mxu0
  %v1159 = vadd.f32 0.0, %v1158
  %v1160 = vpop.f32.mrf.mxu0
  %v1161 = vadd.f32 0.0, %v1160
  %1162 = vdwg.mxu0
  %1169 = vrot.lane.b32.xlu0 %v1149, 32
  %v1170 = vpop.permute.xlu0 %1169
  %1171 = vrot.lane.b32.xlu0 %v1151, 32
  %v1172 = vpop.permute.xlu0 %1171
  %1173 = vrot.lane.b32.xlu0 %v1154, 32
  %v1174 = vpop.permute.xlu0 %1173
  %1175 = vrot.lane.b32.xlu0 %v1156, 32
  %v1176 = vpop.permute.xlu0 %1175
  %1177 = vrot.lane.b32.xlu0 %v1159, 32
  %v1178 = vpop.permute.xlu0 %1177
  %1179 = vrot.lane.b32.xlu0 %v1161, 32
  %v1180 = vpop.permute.xlu0 %1179
  %v1187 = vsel %vm197, %v981, %v1170
  %v1188 = vsel %vm197, %v983, %v1172
  %v1189 = vsel %vm197, %v986, %v1174
  %v1190 = vsel %vm197, %v988, %v1176
  %v1191 = vsel %vm197, %v991, %v1178
  %v1192 = vsel %vm197, %v993, %v1180
  %1199 = vrot.lane.b32.xlu0 %v815, 64
  %v1200 = vpop.permute.xlu0 %1199
  %1201 = vrot.lane.b32.xlu0 %v817, 64
  %v1202 = vpop.permute.xlu0 %1201
  %1203 = vrot.lane.b32.xlu0 %v820, 64
  %v1204 = vpop.permute.xlu0 %1203
  %1205 = vrot.lane.b32.xlu0 %v822, 64
  %v1206 = vpop.permute.xlu0 %1205
  %1207 = vrot.lane.b32.xlu0 %v825, 64
  %v1208 = vpop.permute.xlu0 %1207
  %1209 = vrot.lane.b32.xlu0 %v827, 64
  %v1210 = vpop.permute.xlu0 %1209
  %v1217 = vadd.f32 %v1187, %v1200
  %v1218 = vadd.f32 %v1188, %v1202
  %v1219 = vadd.f32 %v1189, %v1204
  %v1220 = vadd.f32 %v1190, %v1206
  %v1221 = vadd.f32 %v1191, %v1208
  %v1222 = vadd.f32 %v1192, %v1210
  %1225 = vrot.lane.b32.xlu0 %v1219, 64
  %v1226 = vpop.permute.xlu0 %1225
  %1227 = vrot.lane.b32.xlu0 %v1220, 64
  %v1228 = vpop.permute.xlu0 %1227
  %vm1231 = vcmask 523264
  %v1232 = vsel %vm1231, %v1217, %v1226
  %v1233 = vsel %vm1231, %v1218, %v1228
  %v1234 = vpack.c.bf16 %v1233, %v1232
  %v1235 = vpack.c.bf16 %v1222, %v1221
  %v1236 = vld [vmem:[%s9] sm:$0xf]
  %v1237 = vld [vmem:[%s9 + $0x4] sm:$0xf]
  %v1238 = vld [vmem:[%s9 + $0x8] sm:$0xf]
  %v1239 = vld [vmem:[%s9 + $0xc] sm:$0xf]
  %v1240 = vld [vmem:[%s9 + $0x10] sm:$0xf]
  %v1241 = vld [vmem:[%s9 + $0x14] sm:$0xf]
  %v1242 = vld [vmem:[%s9 + $0x18] sm:$0xf]
  %v1243 = vld [vmem:[%s9 + $0x1c] sm:$0xf]
  %v1244 = vld [vmem:[%s9 + $0x20] sm:$0xf]
  %v1245 = vld [vmem:[%s9 + $0x24] sm:$0xf]
  %v1246 = vld [vmem:[%s9 + $0x28] sm:$0xf]
  %v1247 = vld [vmem:[%s9 + $0x2c] sm:$0xf]
  %v1248 = vld [vmem:[%s9 + $0x30] sm:$0xf]
  %v1249 = vld [vmem:[%s9 + $0x34] sm:$0xf]
  %v1250 = vld [vmem:[%s9 + $0x38] sm:$0xf]
  %v1251 = vld [vmem:[%s9 + $0x3c] sm:$0xf]
  %v1252 = vld [vmem:[%s9 + $0x40] sm:$0xf]
  %v1253 = vld [vmem:[%s9 + $0x44] sm:$0xf]
  %v1254 = vld [vmem:[%s9 + $0x48] sm:$0xf]
  %v1255 = vld [vmem:[%s9 + $0x4c] sm:$0xf]
  %v1256 = vld [vmem:[%s9 + $0x50] sm:$0xf]
  %v1257 = vld [vmem:[%s9 + $0x54] sm:$0xf]
  %v1258 = vld [vmem:[%s9 + $0x58] sm:$0xf]
  %v1259 = vld [vmem:[%s9 + $0x5c] sm:$0xf]
  %v1260 = vld [vmem:[%s10] sm:$0x1]
  %v1262 = vperm.slane %v1260, 0
  %v1288 = vunpack.c.l.b16 %v1236
  %v1289 = vunpack.c.l.b16 %v1237
  %v1290 = vunpack.c.l.b16 %v1238
  %v1291 = vunpack.c.l.b16 %v1239
  %v1292 = vunpack.c.l.b16 %v1240
  %v1293 = vunpack.c.l.b16 %v1241
  %v1294 = vunpack.c.l.b16 %v1242
  %v1295 = vunpack.c.l.b16 %v1243
  %v1296 = vunpack.c.l.b16 %v1244
  %v1297 = vunpack.c.l.b16 %v1245
  %v1298 = vunpack.c.l.b16 %v1246
  %v1299 = vunpack.c.l.b16 %v1247
  %v1300 = vunpack.c.l.b16 %v1248
  %v1301 = vunpack.c.l.b16 %v1249
  %v1302 = vunpack.c.l.b16 %v1250
  %v1303 = vunpack.c.l.b16 %v1251
  %v1304 = vunpack.c.l.b16 %v1252
  %v1305 = vunpack.c.l.b16 %v1253
  %v1306 = vunpack.c.l.b16 %v1254
  %v1307 = vunpack.c.l.b16 %v1255
  %v1308 = vunpack.c.l.b16 %v1256
  %v1309 = vunpack.c.l.b16 %v1257
  %v1310 = vunpack.c.l.b16 %v1258
  %v1311 = vunpack.c.l.b16 %v1259
  %v1312 = vpack.c.b16 %v1289, %v1288
  %v1313 = vpack.c.b16 %v1291, %v1290
  %v1314 = vpack.c.b16 %v1293, %v1292
  %v1315 = vpack.c.b16 %v1295, %v1294
  %v1316 = vpack.c.b16 %v1297, %v1296
  %v1317 = vpack.c.b16 %v1299, %v1298
  %v1318 = vpack.c.b16 %v1301, %v1300
  %v1319 = vpack.c.b16 %v1303, %v1302
  %v1320 = vpack.c.b16 %v1305, %v1304
  %v1321 = vpack.c.b16 %v1307, %v1306
  %v1322 = vpack.c.b16 %v1309, %v1308
  %v1323 = vpack.c.b16 %v1311, %v1310
  %v1337 = vsel %vm1231, %v1235, 0
  %1339 = vmatpush.bf16.msra.mxu0 %v1319
  %1340 = vmatpush.bf16.msra.mxu0 %v1318
  %1341 = vmatpush.bf16.msra.mxu0 %v1317
  %1342 = vmatpush.bf16.msra.mxu0 %v1316
  %1343 = vmatpush.bf16.msra.mxu0 %v1315
  %1344 = vmatpush.bf16.msra.mxu0 %v1314
  %1345 = vmatpush.bf16.msra.mxu0 %v1313
  %1346 = vmatpush.bf16.msra.mxu0 %v1312
  %1347 = vmatmul.bf16.gmra.mxu0 %v1234
  %v1348 = vpop.f32.mrf.mxu0
  %v1349 = vadd.f32 %v1262, %v1348
  %v1350 = vpop.f32.mrf.mxu0
  %v1351 = vadd.f32 %v1262, %v1350
  %1352 = vdwg.mxu0
  %1353 = vmatpush.bf16.msra.mxu0 0
  %1354 = vmatpush.bf16.msra.mxu0 0
  %1355 = vmatpush.bf16.msra.mxu0 0
  %1356 = vmatpush.bf16.msra.mxu0 0
  %1357 = vmatpush.bf16.msra.mxu0 %v1323
  %1358 = vmatpush.bf16.msra.mxu0 %v1322
  %1359 = vmatpush.bf16.msra.mxu0 %v1321
  %1360 = vmatpush.bf16.msra.mxu0 %v1320
  %1361 = vmatmul.bf16.gmra.mxu0 %v1337
  %v1362 = vpop.f32.mrf.mxu0
  %v1363 = vadd.f32 %v1349, %v1362
  %v1364 = vpop.f32.mrf.mxu0
  %v1365 = vadd.f32 %v1351, %v1364
  %1366 = vdwg.mxu0
  %v1367 = vmax.f32 %v1363, 0.0
  %v1368 = vmax.f32 %v1365, 0.0
  %v1369 = vpack.c.bf16 %v1368, %v1367
  %v1370 = vld [vmem:[%s11] sm:$0xf]
  %v1371 = vld [vmem:[%s11 + $0x4] sm:$0xf]
  %v1372 = vld [vmem:[%s11 + $0x8] sm:$0xf]
  %v1373 = vld [vmem:[%s11 + $0xc] sm:$0xf]
  %v1374 = vld [vmem:[%s12] sm:$0x1]
  %v1376 = vperm.slane %v1374, 0
  %v1382 = vunpack.c.l.b16 %v1370
  %v1383 = vunpack.c.l.b16 %v1371
  %v1384 = vunpack.c.l.b16 %v1372
  %v1385 = vunpack.c.l.b16 %v1373
  %v1386 = vpack.c.b16 %v1383, %v1382
  %v1387 = vpack.c.b16 %v1385, %v1384
  %v1391 = vsel %vm197, %v1369, 0
  %1393 = vmatpush.bf16.msra.mxu0 0
  %1394 = vmatpush.bf16.msra.mxu0 0
  %1395 = vmatpush.bf16.msra.mxu0 0
  %1396 = vmatpush.bf16.msra.mxu0 0
  %1397 = vmatpush.bf16.msra.mxu0 0
  %1398 = vmatpush.bf16.msra.mxu0 0
  %1399 = vmatpush.bf16.msra.mxu0 %v1387
  %1400 = vmatpush.bf16.msra.mxu0 %v1386
  %1401 = vmatmul.bf16.gmra.mxu0 %v1391
  %v1402 = vpop.f32.mrf.mxu0
  %v1403 = vadd.f32 %v1376, %v1402
  %v1404 = vpop.f32.mrf.mxu0
  %v1405 = vadd.f32 %v1376, %v1404
  %1406 = vdwg.mxu0
  %1407 = vst [vmem:[%s13] sm:$0xff] %v1403
  %1408 = vst [vmem:[%s13 + $0x8] sm:$0xff] %v1405
  // Predicated region
  $region54: #{forward.1} parent=0 // pred_check
    _
  $region55: #{forward.1} parent=0 // pred_check_branch
    %1410 = sbr.rel (0) target = $region57
  $region56: #{forward.1} parent=0 // pred_region
    _
  $region57: #{forward.1} parent=0 // pred_fallthru
    _
  // Predicated region
  $region58: #{forward.1} parent=0 // pred_check
    _
  $region59: #{forward.1} parent=0 // pred_check_branch
    %1412 = sbr.rel (0) target = $region61
  $region60: #{forward.1} parent=0 // pred_region
    _
  $region61: #{forward.1} parent=0 // pred_fallthru
    _

</llo_original>
